<compile_context>
chip_gen: v5e
topology: v5e:2x2
jax: 0.10.0
libtpu: 0.0.40
codegen_flags: <defaults>
</compile_context>

<pallas_src>
import jax
import jax.numpy as jnp
from jax.experimental import pallas as pl
from jax.experimental.pallas import tpu as pltpu

LANE = 128  # TPU lane width; feature dims of the (small) weights pad to this.


def _round_up(x, m):
    return ((x + m - 1) // m) * m


def mlp_kernel(x_ref, w1_ref, b1_ref, w2_ref, b2_ref, w3_ref, b3_ref, o_ref):
    # In-kernel f32 -> bf16 cast: cheap VPU work hidden under the x-tile DMA.
    x = x_ref[...].astype(jnp.bfloat16)
    # fc1 + ReLU (bf16 operands, f32 MXU accumulation, f32 epilogue)
    h = jnp.dot(x, w1_ref[...], preferred_element_type=jnp.float32)
    h = jnp.maximum(h + b1_ref[...], 0.0)
    # hidden layer + ReLU (no_of_hidden_layer = 1)
    h = jnp.dot(h.astype(w2_ref.dtype), w2_ref[...],
                preferred_element_type=jnp.float32)
    h = jnp.maximum(h + b2_ref[...], 0.0)
    # fc2 (no activation); output tile is lane-dense (padded to 128 columns)
    out = jnp.dot(h.astype(w3_ref.dtype), w3_ref[...],
                  preferred_element_type=jnp.float32) + b3_ref[...]
    o_ref[...] = out.astype(o_ref.dtype)
    # TODO(synk): optional fp8 activation path for the first matmul on v7x
    # (accuracy trade-off, left out on purpose).


def classifier_forward(x, params, *, block_b=512,
                       vmem_limit_bytes=48 * 1024 * 1024,
                       out_dtype=jnp.bfloat16):
    """x: (B, input_size) float32 (or bfloat16).  params: dict with
    pre-transposed bf16 weights w1/w2/w3 of shape (in, out) and f32 biases
    b1/b2/b3 of shape (1, out).  Returns (B, n_out) logits in `out_dtype`."""
    w1, b1 = params["w1"], params["b1"]
    w2, b2 = params["w2"], params["b2"]
    w3, b3 = params["w3"], params["b3"]

    B, D_in = x.shape
    H = w1.shape[1]
    n_out = w3.shape[1]

    # Feature-dim padding.  Weights are tiny (done here for simplicity; in
    # production pre-pad once at init).  x is only padded if its feature dim
    # is not lane-aligned — never taken at the production size 1536.
    D_pad = _round_up(D_in, LANE)
    H_pad = _round_up(H, LANE)
    N_pad = _round_up(n_out, LANE)

    x_in = x if D_pad == D_in else jnp.pad(x, ((0, 0), (0, D_pad - D_in)))
    w1p = jnp.pad(w1, ((0, D_pad - D_in), (0, H_pad - H)))
    b1p = jnp.pad(b1, ((0, 0), (0, H_pad - H)))
    w2p = jnp.pad(w2, ((0, H_pad - H), (0, H_pad - H)))
    b2p = jnp.pad(b2, ((0, 0), (0, H_pad - H)))
    w3p = jnp.pad(w3, ((0, H_pad - H), (0, N_pad - n_out)))
    b3p = jnp.pad(b3, ((0, 0), (0, N_pad - n_out)))

    # Batch tiling: multiple of 16 (bf16 sublane packing); default 512 is a
    # multiple of 256 so MXU rows are fully used on v6e/v7x.  No batch pad:
    # the ragged last tile's output writes are masked by Pallas.
    if B >= 16:
        TB = max(16, (min(block_b, B) // 16) * 16)
        B_eff = B
    else:
        # Tiny-batch fallback: one 16-row tile (pads at most 15 rows of x).
        TB = 16
        B_eff = 16
        x_in = jnp.pad(x_in, ((0, B_eff - B), (0, 0)))

    grid = (pl.cdiv(B_eff, TB),)

    def _resident(shape, single_buffer):
        # Constant index_map => block stays VMEM-resident across batch tiles
        # (never re-DMA'd).  With single_buffer the redundant second
        # (double-buffer) VMEM copy is dropped, freeing VMEM for bigger
        # x tiles (most valuable on v7x's 64 MiB VMEM).
        if single_buffer:
            return pl.BlockSpec(shape, lambda i: (0, 0),
                                pipeline_mode=pl.Buffered(1))
        return pl.BlockSpec(shape, lambda i: (0, 0))

    n_tiles = grid[0]
    flops = 2 * n_tiles * TB * (D_pad * H_pad + H_pad * H_pad + H_pad * N_pad)
    bytes_accessed = (
        x_in.size * x_in.dtype.itemsize
        + (w1p.size + w2p.size + w3p.size) * 2
        + (b1p.size + b2p.size + b3p.size) * 4
        + B_eff * N_pad * jnp.dtype(out_dtype).itemsize
    )

    def _run(single_buffer_weights):
        return pl.pallas_call(
            mlp_kernel,
            out_shape=jax.ShapeDtypeStruct((B_eff, N_pad), out_dtype),
            grid_spec=pl.GridSpec(
                grid=grid,
                in_specs=[
                    pl.BlockSpec((TB, D_pad), lambda i: (i, 0)),       # x tile
                    _resident((D_pad, H_pad), single_buffer_weights),  # w1
                    _resident((1, H_pad), single_buffer_weights),      # b1
                    _resident((H_pad, H_pad), single_buffer_weights),  # w2
                    _resident((1, H_pad), single_buffer_weights),      # b2
                    _resident((H_pad, N_pad), single_buffer_weights),  # w3
                    _resident((1, N_pad), single_buffer_weights),      # b3
                ],
                out_specs=pl.BlockSpec((TB, N_pad), lambda i: (i, 0)),
            ),
            compiler_params=pltpu.CompilerParams(
                dimension_semantics=("parallel",),
                vmem_limit_bytes=vmem_limit_bytes,
            ),
            cost_estimate=pl.CostEstimate(
                flops=flops, transcendentals=0, bytes_accessed=bytes_accessed),
        )(x_in, w1p, b1p, w2p, b2p, w3p, b3p)

    try:
        out = _run(True)
    except Exception:
        # pipeline_mode=pl.Buffered(1) unsupported on this jax/backend combo:
        # fall back to the default double-buffered resident weights.
        out = _run(False)

    # Slice off lane padding (and tiny-batch padding).  Consumers that want
    # zero extra HBM traffic can read the padded (B, 128) buffer directly
    # (note: only the first n_out columns are meaningful).
    return out[:B, :n_out]


def init_params(key, input_size, hidden, n_out=2):
    """Deterministic init mimicking nn.Linear's uniform(-1/sqrt(fan_in), ...).
    Weights are stored transposed (in, out) and cast once to bf16 for the MXU;
    biases stay f32."""
    ks = jax.random.split(key, 6)

    def lin(kw, kb, fan_in, fan_out):
        bound = 1.0 / jnp.sqrt(fan_in)
        w = jax.random.uniform(kw, (fan_in, fan_out), jnp.float32, -bound, bound)
        b = jax.random.uniform(kb, (1, fan_out), jnp.float32, -bound, bound)
        return w.astype(jnp.bfloat16), b

    w1, b1 = lin(ks[0], ks[1], input_size, hidden)
    w2, b2 = lin(ks[2], ks[3], hidden, hidden)
    w3, b3 = lin(ks[4], ks[5], hidden, n_out)
    return dict(w1=w1, b1=b1, w2=w2, b2=b2, w3=w3, b3=b3)


def reference_forward(x, p):
    """Pure-JAX reference with the same bf16-operand / f32-accumulate recipe."""
    xb = x.astype(jnp.bfloat16)
    h = jnp.dot(xb, p["w1"], preferred_element_type=jnp.float32) + p["b1"]
    h = jnp.maximum(h, 0.0)
    h = jnp.dot(h.astype(jnp.bfloat16), p["w2"],
                preferred_element_type=jnp.float32) + p["b2"]
    h = jnp.maximum(h, 0.0)
    return jnp.dot(h.astype(jnp.bfloat16), p["w3"],
                   preferred_element_type=jnp.float32) + p["b3"]


def reference_forward_f32(x, p):
    """Full-f32 baseline (approximates the PyTorch f32 module, given the bf16
    master weights)."""
    h = jnp.maximum(x @ p["w1"].astype(jnp.float32) + p["b1"], 0.0)
    h = jnp.maximum(h @ p["w2"].astype(jnp.float32) + p["b2"], 0.0)
    return h @ p["w3"].astype(jnp.float32) + p["b3"]


if __name__ == "__main__":
    # Small stand-ins for the production shapes (input 768*2 = 1536, hidden
    # 256, 2 logits).  input_size=256 is lane-aligned like production, so the
    # pad-free / cast-free x path is exercised; hidden=64 exercises the weight
    # lane padding; batch=130 with TB=128 gives one full + one ragged batch
    # tile (grid length 2), exercising the masked-edge path.
    batch = 130
    input_size = 256
    hidden = 64
    n_out = 2

    key = jax.random.PRNGKey(0)
    kx, kp = jax.random.split(key)
    x = jax.random.normal(kx, (batch, input_size), jnp.float32)
    params = init_params(kp, input_size, hidden, n_out=n_out)

    out = jax.block_until_ready(classifier_forward(x, params))
    assert out.shape == (batch, n_out), out.shape
    out_f32 = out.astype(jnp.float32)

    # Tight check vs a reference using the identical bf16 / f32-accum recipe
    # (tolerance covers the final bf16 logit rounding + accumulation order).
    ref = reference_forward(x, params)
    assert jnp.allclose(out_f32, ref, atol=2e-2, rtol=2e-2), \
        "mismatch vs bf16-recipe reference"

    # Loose sanity check vs a full-f32 baseline (PyTorch-like precision).
    ref32 = reference_forward_f32(x, params)
    assert jnp.allclose(out_f32, ref32, atol=1e-1, rtol=1e-1), \
        "mismatch vs f32 baseline"

    print("KERNEL_OK")
</pallas_src>

<mosaic_0001>
module attributes {stable_mosaic.version = 11 : i64} {
  func.func @mlp_kernel(%arg0: i32, %arg1: memref<128x256xf32, #tpu.memory_space<vmem>>, %arg2: memref<256x128xbf16, #tpu.memory_space<vmem>>, %arg3: memref<1x128xf32, #tpu.memory_space<vmem>>, %arg4: memref<128x128xbf16, #tpu.memory_space<vmem>>, %arg5: memref<1x128xf32, #tpu.memory_space<vmem>>, %arg6: memref<128x128xbf16, #tpu.memory_space<vmem>>, %arg7: memref<1x128xf32, #tpu.memory_space<vmem>>, %arg8: memref<128x128xbf16, #tpu.memory_space<vmem>>) attributes {dimension_semantics = [#tpu.dimension_semantics<parallel>], iteration_bounds = array<i64: 2>, scalar_prefetch = 0 : i64, scratch_operands = 0 : i64, tpu.core_type = #tpu.core_type<tc>, window_params = [{transform_indices = @transform_0, window_bounds = array<i64: 128, 256>}, {pipeline_mode = #tpu.pipeline_mode<synchronous>, transform_indices = @transform_1, window_bounds = array<i64: 256, 128>}, {pipeline_mode = #tpu.pipeline_mode<synchronous>, transform_indices = @transform_2, window_bounds = array<i64: 1, 128>}, {pipeline_mode = #tpu.pipeline_mode<synchronous>, transform_indices = @transform_3, window_bounds = array<i64: 128, 128>}, {pipeline_mode = #tpu.pipeline_mode<synchronous>, transform_indices = @transform_4, window_bounds = array<i64: 1, 128>}, {pipeline_mode = #tpu.pipeline_mode<synchronous>, transform_indices = @transform_5, window_bounds = array<i64: 128, 128>}, {pipeline_mode = #tpu.pipeline_mode<synchronous>, transform_indices = @transform_6, window_bounds = array<i64: 1, 128>}, {transform_indices = @transform_7, window_bounds = array<i64: 128, 128>}]} {
    %c0 = arith.constant 0 : index
    %c0_0 = arith.constant 0 : index
    %0 = vector.load %arg1[%c0, %c0_0] : memref<128x256xf32, #tpu.memory_space<vmem>>, vector<128x256xf32>
    %1 = arith.truncf %0 : vector<128x256xf32> to vector<128x256xbf16>
    %c0_1 = arith.constant 0 : index
    %c0_2 = arith.constant 0 : index
    %2 = vector.load %arg2[%c0_1, %c0_2] : memref<256x128xbf16, #tpu.memory_space<vmem>>, vector<256x128xbf16>
    %cst = arith.constant dense<0.000000e+00> : vector<128x128xf32>
    %3 = tpu.matmul %1, %2, %cst {dimension_numbers = #tpu.dot_dimension_numbers<[1], [0], [0], [1], [0, 0, 1, 1], [], []>} : vector<128x256xbf16>, vector<256x128xbf16>, vector<128x128xf32> -> vector<128x128xf32>
    %c0_3 = arith.constant 0 : index
    %c0_4 = arith.constant 0 : index
    %4 = vector.load %arg3[%c0_3, %c0_4] : memref<1x128xf32, #tpu.memory_space<vmem>>, vector<1x128xf32>
    %5 = vector.broadcast %4 : vector<1x128xf32> to vector<128x128xf32>
    %6 = arith.addf %3, %5 : vector<128x128xf32>
    %cst_5 = arith.constant 0.000000e+00 : f32
    %7 = vector.broadcast %cst_5 : f32 to vector<128x128xf32>
    %8 = arith.maximumf %6, %7 : vector<128x128xf32>
    %9 = arith.truncf %8 : vector<128x128xf32> to vector<128x128xbf16>
    %c0_6 = arith.constant 0 : index
    %c0_7 = arith.constant 0 : index
    %10 = vector.load %arg4[%c0_6, %c0_7] : memref<128x128xbf16, #tpu.memory_space<vmem>>, vector<128x128xbf16>
    %cst_8 = arith.constant dense<0.000000e+00> : vector<128x128xf32>
    %11 = tpu.matmul %9, %10, %cst_8 {dimension_numbers = #tpu.dot_dimension_numbers<[1], [0], [0], [1], [0, 0, 1, 1], [], []>} : vector<128x128xbf16>, vector<128x128xbf16>, vector<128x128xf32> -> vector<128x128xf32>
    %c0_9 = arith.constant 0 : index
    %c0_10 = arith.constant 0 : index
    %12 = vector.load %arg5[%c0_9, %c0_10] : memref<1x128xf32, #tpu.memory_space<vmem>>, vector<1x128xf32>
    %13 = vector.broadcast %12 : vector<1x128xf32> to vector<128x128xf32>
    %14 = arith.addf %11, %13 : vector<128x128xf32>
    %cst_11 = arith.constant 0.000000e+00 : f32
    %15 = vector.broadcast %cst_11 : f32 to vector<128x128xf32>
    %16 = arith.maximumf %14, %15 : vector<128x128xf32>
    %17 = arith.truncf %16 : vector<128x128xf32> to vector<128x128xbf16>
    %c0_12 = arith.constant 0 : index
    %c0_13 = arith.constant 0 : index
    %18 = vector.load %arg6[%c0_12, %c0_13] : memref<128x128xbf16, #tpu.memory_space<vmem>>, vector<128x128xbf16>
    %cst_14 = arith.constant dense<0.000000e+00> : vector<128x128xf32>
    %19 = tpu.matmul %17, %18, %cst_14 {dimension_numbers = #tpu.dot_dimension_numbers<[1], [0], [0], [1], [0, 0, 1, 1], [], []>} : vector<128x128xbf16>, vector<128x128xbf16>, vector<128x128xf32> -> vector<128x128xf32>
    %c0_15 = arith.constant 0 : index
    %c0_16 = arith.constant 0 : index
    %20 = vector.load %arg7[%c0_15, %c0_16] : memref<1x128xf32, #tpu.memory_space<vmem>>, vector<1x128xf32>
    %21 = vector.broadcast %20 : vector<1x128xf32> to vector<128x128xf32>
    %22 = arith.addf %19, %21 : vector<128x128xf32>
    %23 = arith.truncf %22 : vector<128x128xf32> to vector<128x128xbf16>
    %c0_17 = arith.constant 0 : index
    %c0_18 = arith.constant 0 : index
    %24 = vector.load %arg8[%c0_17, %c0_18] : memref<128x128xbf16, #tpu.memory_space<vmem>>, vector<128x128xbf16>
    tpu.vector_store %arg8[%c0_17, %c0_18], %23 {strides = array<i32>} : memref<128x128xbf16, #tpu.memory_space<vmem>>, vector<128x128xbf16>,
    return
  }
  func.func @transform_0(%arg0: i32) -> (i32, i32) {
    %c0_i32 = arith.constant 0 : i32
    %c0_i32_0 = arith.constant 0 : i32
    return %arg0, %c0_i32 : i32, i32
  }
  func.func @transform_1(%arg0: i32) -> (i32, i32) {
    %c0_i32 = arith.constant 0 : i32
    %c0_i32_0 = arith.constant 0 : i32
    %c0_i32_1 = arith.constant 0 : i32
    return %c0_i32, %c0_i32_0 : i32, i32
  }
  func.func @transform_2(%arg0: i32) -> (i32, i32) {
    %c0_i32 = arith.constant 0 : i32
    %c0_i32_0 = arith.constant 0 : i32
    %c0_i32_1 = arith.constant 0 : i32
    return %c0_i32, %c0_i32_0 : i32, i32
  }
  func.func @transform_3(%arg0: i32) -> (i32, i32) {
    %c0_i32 = arith.constant 0 : i32
    %c0_i32_0 = arith.constant 0 : i32
    %c0_i32_1 = arith.constant 0 : i32
    return %c0_i32, %c0_i32_0 : i32, i32
  }
  func.func @transform_4(%arg0: i32) -> (i32, i32) {
    %c0_i32 = arith.constant 0 : i32
    %c0_i32_0 = arith.constant 0 : i32
    %c0_i32_1 = arith.constant 0 : i32
    return %c0_i32, %c0_i32_0 : i32, i32
  }
  func.func @transform_5(%arg0: i32) -> (i32, i32) {
    %c0_i32 = arith.constant 0 : i32
    %c0_i32_0 = arith.constant 0 : i32
    %c0_i32_1 = arith.constant 0 : i32
    return %c0_i32, %c0_i32_0 : i32, i32
  }
  func.func @transform_6(%arg0: i32) -> (i32, i32) {
    %c0_i32 = arith.constant 0 : i32
    %c0_i32_0 = arith.constant 0 : i32
    %c0_i32_1 = arith.constant 0 : i32
    return %c0_i32, %c0_i32_0 : i32, i32
  }
  func.func @transform_7(%arg0: i32) -> (i32, i32) {
    %c0_i32 = arith.constant 0 : i32
    %c0_i32_0 = arith.constant 0 : i32
    return %arg0, %c0_i32 : i32, i32
  }
}

module attributes {stable_mosaic.version = 11 : i64} {
  func.func @mlp_kernel(%arg0: i32, %arg1: memref<128x256xf32, #tpu.memory_space<vmem>>, %arg2: memref<256x128xbf16, #tpu.memory_space<vmem>>, %arg3: memref<1x128xf32, #tpu.memory_space<vmem>>, %arg4: memref<128x128xbf16, #tpu.memory_space<vmem>>, %arg5: memref<1x128xf32, #tpu.memory_space<vmem>>, %arg6: memref<128x128xbf16, #tpu.memory_space<vmem>>, %arg7: memref<1x128xf32, #tpu.memory_space<vmem>>, %arg8: memref<128x128xbf16, #tpu.memory_space<vmem>>) attributes {dimension_semantics = [#tpu.dimension_semantics<parallel>], iteration_bounds = array<i64: 2>, scalar_prefetch = 0 : i64, scratch_operands = 0 : i64, tpu.core_type = #tpu.core_type<tc>, window_params = [{transform_indices = @transform_0, window_bounds = array<i64: 128, 256>}, {pipeline_mode = #tpu.pipeline_mode<synchronous>, transform_indices = @transform_1, window_bounds = array<i64: 256, 128>}, {pipeline_mode = #tpu.pipeline_mode<synchronous>, transform_indices = @transform_2, window_bounds = array<i64: 1, 128>}, {pipeline_mode = #tpu.pipeline_mode<synchronous>, transform_indices = @transform_3, window_bounds = array<i64: 128, 128>}, {pipeline_mode = #tpu.pipeline_mode<synchronous>, transform_indices = @transform_4, window_bounds = array<i64: 1, 128>}, {pipeline_mode = #tpu.pipeline_mode<synchronous>, transform_indices = @transform_5, window_bounds = array<i64: 128, 128>}, {pipeline_mode = #tpu.pipeline_mode<synchronous>, transform_indices = @transform_6, window_bounds = array<i64: 1, 128>}, {transform_indices = @transform_7, window_bounds = array<i64: 128, 128>}]} {
    %c0 = arith.constant 0 : index
    %c0_0 = arith.constant 0 : index
    %0 = vector.load %arg1[%c0, %c0_0] : memref<128x256xf32, #tpu.memory_space<vmem>>, vector<128x256xf32>
    %1 = arith.truncf %0 : vector<128x256xf32> to vector<128x256xbf16>
    %c0_1 = arith.constant 0 : index
    %c0_2 = arith.constant 0 : index
    %2 = vector.load %arg2[%c0_1, %c0_2] : memref<256x128xbf16, #tpu.memory_space<vmem>>, vector<256x128xbf16>
    %cst = arith.constant dense<0.000000e+00> : vector<128x128xf32>
    %3 = tpu.matmul %1, %2, %cst {dimension_numbers = #tpu.dot_dimension_numbers<[1], [0], [0], [1], [0, 0, 1, 1], [], []>} : vector<128x256xbf16>, vector<256x128xbf16>, vector<128x128xf32> -> vector<128x128xf32>
    %c0_3 = arith.constant 0 : index
    %c0_4 = arith.constant 0 : index
    %4 = vector.load %arg3[%c0_3, %c0_4] : memref<1x128xf32, #tpu.memory_space<vmem>>, vector<1x128xf32>
    %5 = vector.broadcast %4 : vector<1x128xf32> to vector<128x128xf32>
    %6 = arith.addf %3, %5 : vector<128x128xf32>
    %cst_5 = arith.constant 0.000000e+00 : f32
    %7 = vector.broadcast %cst_5 : f32 to vector<128x128xf32>
    %8 = arith.maximumf %6, %7 : vector<128x128xf32>
    %9 = arith.truncf %8 : vector<128x128xf32> to vector<128x128xbf16>
    %c0_6 = arith.constant 0 : index
    %c0_7 = arith.constant 0 : index
    %10 = vector.load %arg4[%c0_6, %c0_7] : memref<128x128xbf16, #tpu.memory_space<vmem>>, vector<128x128xbf16>
    %cst_8 = arith.constant dense<0.000000e+00> : vector<128x128xf32>
    %11 = tpu.matmul %9, %10, %cst_8 {dimension_numbers = #tpu.dot_dimension_numbers<[1], [0], [0], [1], [0, 0, 1, 1], [], []>} : vector<128x128xbf16>, vector<128x128xbf16>, vector<128x128xf32> -> vector<128x128xf32>
    %c0_9 = arith.constant 0 : index
    %c0_10 = arith.constant 0 : index
    %12 = vector.load %arg5[%c0_9, %c0_10] : memref<1x128xf32, #tpu.memory_space<vmem>>, vector<1x128xf32>
    %13 = vector.broadcast %12 : vector<1x128xf32> to vector<128x128xf32>
    %14 = arith.addf %11, %13 : vector<128x128xf32>
    %cst_11 = arith.constant 0.000000e+00 : f32
    %15 = vector.broadcast %cst_11 : f32 to vector<128x128xf32>
    %16 = arith.maximumf %14, %15 : vector<128x128xf32>
    %17 = arith.truncf %16 : vector<128x128xf32> to vector<128x128xbf16>
    %c0_12 = arith.constant 0 : index
    %c0_13 = arith.constant 0 : index
    %18 = vector.load %arg6[%c0_12, %c0_13] : memref<128x128xbf16, #tpu.memory_space<vmem>>, vector<128x128xbf16>
    %cst_14 = arith.constant dense<0.000000e+00> : vector<128x128xf32>
    %19 = tpu.matmul %17, %18, %cst_14 {dimension_numbers = #tpu.dot_dimension_numbers<[1], [0], [0], [1], [0, 0, 1, 1], [], []>} : vector<128x128xbf16>, vector<128x128xbf16>, vector<128x128xf32> -> vector<128x128xf32>
    %c0_15 = arith.constant 0 : index
    %c0_16 = arith.constant 0 : index
    %20 = vector.load %arg7[%c0_15, %c0_16] : memref<1x128xf32, #tpu.memory_space<vmem>>, vector<1x128xf32>
    %21 = vector.broadcast %20 : vector<1x128xf32> to vector<128x128xf32>
    %22 = arith.addf %19, %21 : vector<128x128xf32>
    %23 = arith.truncf %22 : vector<128x128xf32> to vector<128x128xbf16>
    %c0_17 = arith.constant 0 : index
    %c0_18 = arith.constant 0 : index
    %24 = vector.load %arg8[%c0_17, %c0_18] : memref<128x128xbf16, #tpu.memory_space<vmem>>, vector<128x128xbf16>
    tpu.vector_store %arg8[%c0_17, %c0_18], %23 {strides = array<i32>} : memref<128x128xbf16, #tpu.memory_space<vmem>>, vector<128x128xbf16>,
    return
  }
  func.func @transform_0(%arg0: i32) -> (i32, i32) {
    %c0_i32 = arith.constant 0 : i32
    %c0_i32_0 = arith.constant 0 : i32
    return %arg0, %c0_i32 : i32, i32
  }
  func.func @transform_1(%arg0: i32) -> (i32, i32) {
    %c0_i32 = arith.constant 0 : i32
    %c0_i32_0 = arith.constant 0 : i32
    %c0_i32_1 = arith.constant 0 : i32
    return %c0_i32, %c0_i32_0 : i32, i32
  }
  func.func @transform_2(%arg0: i32) -> (i32, i32) {
    %c0_i32 = arith.constant 0 : i32
    %c0_i32_0 = arith.constant 0 : i32
    %c0_i32_1 = arith.constant 0 : i32
    return %c0_i32, %c0_i32_0 : i32, i32
  }
  func.func @transform_3(%arg0: i32) -> (i32, i32) {
    %c0_i32 = arith.constant 0 : i32
    %c0_i32_0 = arith.constant 0 : i32
    %c0_i32_1 = arith.constant 0 : i32
    return %c0_i32, %c0_i32_0 : i32, i32
  }
  func.func @transform_4(%arg0: i32) -> (i32, i32) {
    %c0_i32 = arith.constant 0 : i32
    %c0_i32_0 = arith.constant 0 : i32
    %c0_i32_1 = arith.constant 0 : i32
    return %c0_i32, %c0_i32_0 : i32, i32
  }
  func.func @transform_5(%arg0: i32) -> (i32, i32) {
    %c0_i32 = arith.constant 0 : i32
    %c0_i32_0 = arith.constant 0 : i32
    %c0_i32_1 = arith.constant 0 : i32
    return %c0_i32, %c0_i32_0 : i32, i32
  }
  func.func @transform_6(%arg0: i32) -> (i32, i32) {
    %c0_i32 = arith.constant 0 : i32
    %c0_i32_0 = arith.constant 0 : i32
    %c0_i32_1 = arith.constant 0 : i32
    return %c0_i32, %c0_i32_0 : i32, i32
  }
  func.func @transform_7(%arg0: i32) -> (i32, i32) {
    %c0_i32 = arith.constant 0 : i32
    %c0_i32_0 = arith.constant 0 : i32
    return %arg0, %c0_i32 : i32, i32
  }
}

</mosaic_0001>

<llo_original>
// kernel: tpu_custom_call.1
$region0: #{tpu_custom_call.1}
  #allocation0 [shape = 'u32[]', space=smem, size = 0x4, offset = 0x4, fixed_abs, tag = 'smem constant byte address 0x4 - core index']
  #allocation1 [shape = 'u32[72,128]{1,0:T(1,128)}', space=vmem, size = 0x9000, scoped, tag = 'internal scratch']
  %s0 = inlined_call_operand.hbm [shape: f32[130,256], index: 0, kind: input, shape index: {}]
  %s1 = inlined_call_operand.hbm [shape: bf16[256,128], index: 1, kind: input, shape index: {}]
  %s2 = inlined_call_operand.vmem [shape: f32[1,128], index: 2, kind: input, shape index: {}]
  %s3 = inlined_call_operand.hbm [shape: bf16[128,128], index: 3, kind: input, shape index: {}]
  %s4 = inlined_call_operand.vmem [shape: f32[1,128], index: 4, kind: input, shape index: {}]
  %s5 = inlined_call_operand.hbm [shape: bf16[128,128], index: 5, kind: input, shape index: {}]
  %s6 = inlined_call_operand.vmem [shape: f32[1,128], index: 6, kind: input, shape index: {}]
  %s7 = inlined_call_operand.hbm [shape: bf16[130,128], index: 7, kind: output, shape index: {}]
  %s8 = sld [smem:[#allocation0]]
  $region77: #{tpu_custom_call.1} parent=0
    _
  %s10 = ssub.s32 1, %s8
  %s11 = scalar_select 0, %s10, %s8
  $region1: #{tpu_custom_call.1} parent=0
    #allocation2 [shape = 'u8[262144]{0}', space=vmem, size = 0x40000, scoped, tag = 'input window, operand 0']
    #allocation3 [shape = 's32[2]{0}', space=sflag, size = 0x8, scoped, tag = 'scoped memory for tpu_custom_call.1']
    #allocation4 [shape = 's32[2]{0}', space=sflag, size = 0x8, scoped, tag = 'scoped memory for tpu_custom_call.1']
    #allocation5 [shape = 'u8[65536]{0}', space=vmem, size = 0x10000, scoped, tag = 'input window, operand 1, single buffered']
    #allocation6 [shape = 's32[1]{0}', space=sflag, size = 0x4, scoped, tag = 'scoped memory for tpu_custom_call.1']
    #allocation7 [shape = 'u8[32768]{0}', space=vmem, size = 0x8000, scoped, tag = 'input window, operand 3, single buffered']
    #allocation8 [shape = 'u8[32768]{0}', space=vmem, size = 0x8000, scoped, tag = 'input window, operand 5, single buffered']
    #allocation9 [shape = 's32[1]{0}', space=sflag, size = 0x4, scoped, tag = 'scoped memory for tpu_custom_call.1']
    #allocation10 [shape = 'u8[65536]{0}', space=vmem, size = 0x10000, scoped, tag = 'output window, operand 0']
    %12 = vsyncpa [#allocation3], 0
    %s13 = scalar_lea.sflag [#allocation3], 1
    %14 = vsyncpa %s13, 0
    %15 = vsyncpa [#allocation6], 0
    %16 = vsyncpa [#allocation9], 0
    %17 = vsyncpa [#allocation4], 0
    %s18 = scalar_lea.sflag [#allocation4], 1
    %19 = vsyncpa %s18, 0
    loop: start=0, step=1, limit=4
    $region2: #{tpu_custom_call.1} parent=1 // loop_pre_header
      _
    $region3: #{tpu_custom_call.1} parent=1 // loop_header
      %s21 = sphi 0, %s25
      %p22 = scmp.ge.s32.totalorder %s21, 4
      %s31 = sphi 0, %s33
      %s34 = sphi 0, %s31
      %s35 = sphi 0, %s34
      %s51 = sphi 0, %s35
      %s55 = sphi 0, %s55
      %s57 = sphi 0, %s55
      %s58 = sphi 0, %s57
      %s72 = sphi 0, %s58
      %s76 = sphi 0, %s76
      %s78 = sphi 0, %s76
      %s79 = sphi 0, %s78
      %s93 = sphi 0, %s79
      %s97 = sphi 0, %s97
      %s99 = sphi 0, %s97
      %s100 = sphi 0, %s99
      %s114 = sphi 0, %s100
      %s118 = sphi 0, %s118
      %s120 = sphi 0, %s118
      %s121 = sphi 0, %s120
      %s135 = sphi 0, %s121
      %s139 = sphi 0, %s139
      %s141 = sphi 0, %s139
      %s142 = sphi 0, %s141
      %s156 = sphi 0, %s142
      %s160 = sphi 0, %s160
      %s162 = sphi 0, %s160
      %s163 = sphi 0, %s162
      %s177 = sphi 0, %s163
      %s183 = sphi 0, %s185
      %s186 = sphi 0, %s183
      %s187 = sphi 0, %s186
      %s203 = sphi 0, %s187
    $region4: #{tpu_custom_call.1} parent=1 // loop_header_branch
      %24 = sbr.rel (%p22) target = $region8
    $region5: #{tpu_custom_call.1} parent=1 // loop_body
      %s26 = ssub.s32 %s21, 1
      %s27 = ssub.s32 %s21, 2
      %s28 = sadd.s32 %s21, 1
      %s29 = ssub.s32 %s21, %s28
      %p30 = scmp.eq.s32.totalorder %s29, 0
      %s32 = sadd.s32 %s31, 1
      %s33 = scalar_select %p30, %s31, %s32
      %p36 = pneg %p30
      %p37 = scmp.eq.s32.totalorder %s21, 1
      %p38 = por %p36, %p37
      %p39 = scmp.ne.s32.totalorder %s31, %s34
      %p40 = scmp.eq.s32.totalorder %s21, 0
      %p41 = por %p39, %p40
      %p42 = scmp.ne.s32.totalorder %s31, %s34
      %p43 = scmp.eq.s32.totalorder %s26, 1
      %p44 = por %p42, %p43
      %p45 = scmp.ne.s32.totalorder %s34, %s35
      %p46 = scmp.eq.s32.totalorder %s26, 0
      %p47 = por %p45, %p46
      %p48 = scmp.ne.s32.totalorder %s34, %s35
      %p49 = scmp.eq.s32.totalorder %s27, 1
      %p50 = por %p48, %p49
      %p52 = scmp.ne.s32.totalorder %s35, %s51
      %p53 = scmp.eq.s32.totalorder %s27, 0
      %p54 = por %p52, %p53
      %s56 = sadd.s32 %s55, 1
      %p59 = scmp.eq.s32.totalorder %s21, 1
      %p60 = scmp.ne.s32.totalorder %s55, %s57
      %p61 = scmp.eq.s32.totalorder %s21, 0
      %p62 = por %p60, %p61
      %p63 = scmp.ne.s32.totalorder %s55, %s57
      %p64 = scmp.eq.s32.totalorder %s26, 1
      %p65 = por %p63, %p64
      %p66 = scmp.ne.s32.totalorder %s57, %s58
      %p67 = scmp.eq.s32.totalorder %s26, 0
      %p68 = por %p66, %p67
      %p69 = scmp.ne.s32.totalorder %s57, %s58
      %p70 = scmp.eq.s32.totalorder %s27, 1
      %p71 = por %p69, %p70
      %p73 = scmp.ne.s32.totalorder %s58, %s72
      %p74 = scmp.eq.s32.totalorder %s27, 0
      %p75 = por %p73, %p74
      %s77 = sadd.s32 %s76, 1
      %p80 = scmp.eq.s32.totalorder %s21, 1
      %p81 = scmp.ne.s32.totalorder %s76, %s78
      %p82 = scmp.eq.s32.totalorder %s21, 0
      %p83 = por %p81, %p82
      %p84 = scmp.ne.s32.totalorder %s76, %s78
      %p85 = scmp.eq.s32.totalorder %s26, 1
      %p86 = por %p84, %p85
      %p87 = scmp.ne.s32.totalorder %s78, %s79
      %p88 = scmp.eq.s32.totalorder %s26, 0
      %p89 = por %p87, %p88
      %p90 = scmp.ne.s32.totalorder %s78, %s79
      %p91 = scmp.eq.s32.totalorder %s27, 1
      %p92 = por %p90, %p91
      %p94 = scmp.ne.s32.totalorder %s79, %s93
      %p95 = scmp.eq.s32.totalorder %s27, 0
      %p96 = por %p94, %p95
      %s98 = sadd.s32 %s97, 1
      %p101 = scmp.eq.s32.totalorder %s21, 1
      %p102 = scmp.ne.s32.totalorder %s97, %s99
      %p103 = scmp.eq.s32.totalorder %s21, 0
      %p104 = por %p102, %p103
      %p105 = scmp.ne.s32.totalorder %s97, %s99
      %p106 = scmp.eq.s32.totalorder %s26, 1
      %p107 = por %p105, %p106
      %p108 = scmp.ne.s32.totalorder %s99, %s100
      %p109 = scmp.eq.s32.totalorder %s26, 0
      %p110 = por %p108, %p109
      %p111 = scmp.ne.s32.totalorder %s99, %s100
      %p112 = scmp.eq.s32.totalorder %s27, 1
      %p113 = por %p111, %p112
      %p115 = scmp.ne.s32.totalorder %s100, %s114
      %p116 = scmp.eq.s32.totalorder %s27, 0
      %p117 = por %p115, %p116
      %s119 = sadd.s32 %s118, 1
      %p122 = scmp.eq.s32.totalorder %s21, 1
      %p123 = scmp.ne.s32.totalorder %s118, %s120
      %p124 = scmp.eq.s32.totalorder %s21, 0
      %p125 = por %p123, %p124
      %p126 = scmp.ne.s32.totalorder %s118, %s120
      %p127 = scmp.eq.s32.totalorder %s26, 1
      %p128 = por %p126, %p127
      %p129 = scmp.ne.s32.totalorder %s120, %s121
      %p130 = scmp.eq.s32.totalorder %s26, 0
      %p131 = por %p129, %p130
      %p132 = scmp.ne.s32.totalorder %s120, %s121
      %p133 = scmp.eq.s32.totalorder %s27, 1
      %p134 = por %p132, %p133
      %p136 = scmp.ne.s32.totalorder %s121, %s135
      %p137 = scmp.eq.s32.totalorder %s27, 0
      %p138 = por %p136, %p137
      %s140 = sadd.s32 %s139, 1
      %p143 = scmp.eq.s32.totalorder %s21, 1
      %p144 = scmp.ne.s32.totalorder %s139, %s141
      %p145 = scmp.eq.s32.totalorder %s21, 0
      %p146 = por %p144, %p145
      %p147 = scmp.ne.s32.totalorder %s139, %s141
      %p148 = scmp.eq.s32.totalorder %s26, 1
      %p149 = por %p147, %p148
      %p150 = scmp.ne.s32.totalorder %s141, %s142
      %p151 = scmp.eq.s32.totalorder %s26, 0
      %p152 = por %p150, %p151
      %p153 = scmp.ne.s32.totalorder %s141, %s142
      %p154 = scmp.eq.s32.totalorder %s27, 1
      %p155 = por %p153, %p154
      %p157 = scmp.ne.s32.totalorder %s142, %s156
      %p158 = scmp.eq.s32.totalorder %s27, 0
      %p159 = por %p157, %p158
      %s161 = sadd.s32 %s160, 1
      %p164 = scmp.eq.s32.totalorder %s21, 1
      %p165 = scmp.ne.s32.totalorder %s160, %s162
      %p166 = scmp.eq.s32.totalorder %s21, 0
      %p167 = por %p165, %p166
      %p168 = scmp.ne.s32.totalorder %s160, %s162
      %p169 = scmp.eq.s32.totalorder %s26, 1
      %p170 = por %p168, %p169
      %p171 = scmp.ne.s32.totalorder %s162, %s163
      %p172 = scmp.eq.s32.totalorder %s26, 0
      %p173 = por %p171, %p172
      %p174 = scmp.ne.s32.totalorder %s162, %s163
      %p175 = scmp.eq.s32.totalorder %s27, 1
      %p176 = por %p174, %p175
      %p178 = scmp.ne.s32.totalorder %s163, %s177
      %p179 = scmp.eq.s32.totalorder %s27, 0
      %p180 = por %p178, %p179
      %s181 = ssub.s32 %s21, %s28
      %p182 = scmp.eq.s32.totalorder %s181, 0
      %s184 = sadd.s32 %s183, 1
      %s185 = scalar_select %p182, %s183, %s184
      %p188 = pneg %p182
      %p189 = scmp.eq.s32.totalorder %s21, 1
      %p190 = por %p188, %p189
      %p191 = scmp.ne.s32.totalorder %s183, %s186
      %p192 = scmp.eq.s32.totalorder %s21, 0
      %p193 = por %p191, %p192
      %p194 = scmp.ne.s32.totalorder %s183, %s186
      %p195 = scmp.eq.s32.totalorder %s26, 1
      %p196 = por %p194, %p195
      %p197 = scmp.ne.s32.totalorder %s186, %s187
      %p198 = scmp.eq.s32.totalorder %s26, 0
      %p199 = por %p197, %p198
      %p200 = scmp.ne.s32.totalorder %s186, %s187
      %p201 = scmp.eq.s32.totalorder %s27, 1
      %p202 = por %p200, %p201
      %p204 = scmp.ne.s32.totalorder %s187, %s203
      %p205 = scmp.eq.s32.totalorder %s27, 0
      %p206 = por %p204, %p205
      %p207 = scmp.le.s32.totalorder 1, %s21
      %p208 = scmp.lt.s32.totalorder %s21, 3
      %p209 = pnand %p207, %p208
      %p210 = pneg %p209
      // Predicated region
      $region9: #{tpu_custom_call.1} parent=5 // pred_check
        _
      $region10: #{tpu_custom_call.1} parent=5 // pred_check_branch
        %212 = sbr.rel (%p209) target = $region12
      $region11: #{tpu_custom_call.1} parent=5 // pred_region
        %s213 = ssub.s32 %s21, 1
        // Predicated region
        $region13: #{tpu_custom_call.1} parent=11 // pred_check
          %p214 = pneg %p68
        $region14: #{tpu_custom_call.1} parent=11 // pred_check_branch
          %216 = sbr.rel (%p214) target = $region16
        $region15: #{tpu_custom_call.1} parent=11 // pred_region
          %218 = vsyncadd [#allocation6], 0
          %s219 = sshll.u32 %s1, 4
          %s220 = int_to_ptr.hbm [resolvable:$true] %s219
          %s221 = sshll.u32 [#allocation5], 4
          %s222 = int_to_ptr.vmem [resolvable:$true] %s221
          %227 = dma.hbm_to_vmem [thread:$0]  %s220, 2048, %s222, [#allocation6], 64, 64, 4
        $region16: #{tpu_custom_call.1} parent=11 // pred_fallthru
          _
        // Predicated region
        $region17: #{tpu_custom_call.1} parent=11 // pred_check
          %p228 = pneg %p89
        $region18: #{tpu_custom_call.1} parent=11 // pred_check_branch
          %230 = sbr.rel (%p228) target = $region20
        $region19: #{tpu_custom_call.1} parent=11 // pred_region
          _
        $region20: #{tpu_custom_call.1} parent=11 // pred_fallthru
          _
        // Predicated region
        $region21: #{tpu_custom_call.1} parent=11 // pred_check
          %p231 = pneg %p110
        $region22: #{tpu_custom_call.1} parent=11 // pred_check_branch
          %233 = sbr.rel (%p231) target = $region24
        $region23: #{tpu_custom_call.1} parent=11 // pred_region
          %235 = vsyncadd [#allocation6], 0
          %s236 = sshll.u32 %s3, 4
          %s237 = int_to_ptr.hbm [resolvable:$true] %s236
          %s238 = sshll.u32 [#allocation7], 4
          %s239 = int_to_ptr.vmem [resolvable:$true] %s238
          %244 = dma.hbm_to_vmem [thread:$0]  %s237, 1024, %s239, [#allocation6], 64, 64, 4
        $region24: #{tpu_custom_call.1} parent=11 // pred_fallthru
          _
        // Predicated region
        $region25: #{tpu_custom_call.1} parent=11 // pred_check
          %p245 = pneg %p131
        $region26: #{tpu_custom_call.1} parent=11 // pred_check_branch
          %247 = sbr.rel (%p245) target = $region28
        $region27: #{tpu_custom_call.1} parent=11 // pred_region
          _
        $region28: #{tpu_custom_call.1} parent=11 // pred_fallthru
          _
        // Predicated region
        $region29: #{tpu_custom_call.1} parent=11 // pred_check
          %p248 = pneg %p152
        $region30: #{tpu_custom_call.1} parent=11 // pred_check_branch
          %250 = sbr.rel (%p248) target = $region32
        $region31: #{tpu_custom_call.1} parent=11 // pred_region
          %252 = vsyncadd [#allocation9], 0
          %s253 = sshll.u32 %s5, 4
          %s254 = int_to_ptr.hbm [resolvable:$true] %s253
          %s255 = sshll.u32 [#allocation8], 4
          %s256 = int_to_ptr.vmem [resolvable:$true] %s255
          %261 = dma.hbm_to_vmem [thread:$0]  %s254, 1024, %s256, [#allocation9], 64, 64, 4
        $region32: #{tpu_custom_call.1} parent=11 // pred_fallthru
          _
        // Predicated region
        $region33: #{tpu_custom_call.1} parent=11 // pred_check
          %p262 = pneg %p173
        $region34: #{tpu_custom_call.1} parent=11 // pred_check_branch
          %264 = sbr.rel (%p262) target = $region36
        $region35: #{tpu_custom_call.1} parent=11 // pred_region
          _
        $region36: #{tpu_custom_call.1} parent=11 // pred_fallthru
          _
      $region12: #{tpu_custom_call.1} parent=5 // pred_fallthru
        _
      %p265 = scmp.lt.s32.totalorder %s21, 2
      // Predicated region
      $region37: #{tpu_custom_call.1} parent=5 // pred_check
        %p266 = pneg %p265
      $region38: #{tpu_custom_call.1} parent=5 // pred_check_branch
        %268 = sbr.rel (%p266) target = $region40
      $region39: #{tpu_custom_call.1} parent=5 // pred_region
        // Predicated region
        $region41: #{tpu_custom_call.1} parent=39 // pred_check
          %p269 = pneg %p41
        $region42: #{tpu_custom_call.1} parent=39 // pred_check_branch
          %271 = sbr.rel (%p269) target = $region44
        $region43: #{tpu_custom_call.1} parent=39 // pred_region
          %s272 = sand.u32 %s31, 1
          %s273 = scalar_lea.sflag [#allocation3], %s272
          %s274 = sand.u32 %s31, 1
          %s275 = smul.addr %s274, 256
          %s276 = scalar_lea.vmem [#allocation2], %s275
          %s277 = smul.u32 16, %s21
          %s278 = ssub.s32 17, %s277
          %p279 = scmp.lt.s32.totalorder %s278, 16
          %s280 = scalar_select %p279, %s278, 16
          %s281 = smul.u32 8, %s280
          %s282 = smul.u32 %s281, 2
          %s283 = ssub.s32 256, %s282
          %s284 = sshll.u32 %s283, 4
          %285 = vsyncadd %s273, %s284
          %p286 = scmp.ne.s32.totalorder 0, %s282
          %s287 = smul.addr %s277, 2
          %s288 = smul.addr %s287, 8
          %s289 = scalar_lea.hbm %s0, %s288
          %s290 = smul.u32 16, %s280
          %s291 = sshll.u32 %s289, 4
          %s292 = int_to_ptr.hbm [resolvable:$true] %s291
          %s293 = sshll.u32 %s276, 4
          %s294 = int_to_ptr.vmem [resolvable:$true] %s293
          %s295 = sshll.u32 %s290, 4
          %299 = dma.hbm_to_vmem [thread:$0]  (%p286), %s292, %s295, %s294, %s273, 256, 256, 16
        $region44: #{tpu_custom_call.1} parent=39 // pred_fallthru
          _
      $region40: #{tpu_custom_call.1} parent=5 // pred_fallthru
        _
      %p300 = scmp.le.s32.totalorder 1, %s21
      %p301 = scmp.lt.s32.totalorder %s21, 3
      %p302 = pnand %p300, %p301
      %p303 = pneg %p302
      // Predicated region
      $region45: #{tpu_custom_call.1} parent=5 // pred_check
        _
      $region46: #{tpu_custom_call.1} parent=5 // pred_check_branch
        %305 = sbr.rel (%p302) target = $region48
      $region47: #{tpu_custom_call.1} parent=5 // pred_region
        %s306 = ssub.s32 %s21, 1
        %s307 = sand.u32 %s34, 1
        %s308 = scalar_lea.sflag [#allocation3], %s307
        %s309 = sand.u32 %s34, 1
        %s310 = smul.addr %s309, 256
        %s311 = scalar_lea.vmem [#allocation2], %s310
        // Predicated region
        $region49: #{tpu_custom_call.1} parent=47 // pred_check
          %p312 = pneg %p47
        $region50: #{tpu_custom_call.1} parent=47 // pred_check_branch
          %314 = sbr.rel (%p312) target = $region52
        $region51: #{tpu_custom_call.1} parent=47 // pred_region
          %316 = dma.done %s308, 4096
        $region52: #{tpu_custom_call.1} parent=47 // pred_fallthru
          _
        // Predicated region
        $region53: #{tpu_custom_call.1} parent=47 // pred_check
          %p317 = pneg %p68
        $region54: #{tpu_custom_call.1} parent=47 // pred_check_branch
          %319 = sbr.rel (%p317) target = $region56
        $region55: #{tpu_custom_call.1} parent=47 // pred_region
          %321 = dma.done [#allocation6], 2048
        $region56: #{tpu_custom_call.1} parent=47 // pred_fallthru
          _
        // Predicated region
        $region57: #{tpu_custom_call.1} parent=47 // pred_check
          %p322 = pneg %p110
        $region58: #{tpu_custom_call.1} parent=47 // pred_check_branch
          %324 = sbr.rel (%p322) target = $region60
        $region59: #{tpu_custom_call.1} parent=47 // pred_region
          %326 = dma.done [#allocation6], 1024
        $region60: #{tpu_custom_call.1} parent=47 // pred_fallthru
          _
        // Predicated region
        $region61: #{tpu_custom_call.1} parent=47 // pred_check
          %p327 = pneg %p152
        $region62: #{tpu_custom_call.1} parent=47 // pred_check_branch
          %329 = sbr.rel (%p327) target = $region64
        $region63: #{tpu_custom_call.1} parent=47 // pred_region
          %331 = dma.done [#allocation9], 1024
        $region64: #{tpu_custom_call.1} parent=47 // pred_fallthru
          _
        %s332 = sand.u32 %s34, 1
        %s333 = scalar_lea.sflag [#allocation3], %s332
        %s334 = sand.u32 %s34, 1
        %s335 = smul.addr %s334, 256
        %s336 = scalar_lea.vmem [#allocation2], %s335
        %p337 = pneg %p47
        %p338 = pneg %p44
        %p339 = pneg %p68
        %p340 = pneg %p65
        %p341 = pneg %p89
        %p342 = pneg %p86
        %p343 = pneg %p110
        %p344 = pneg %p107
        %p345 = pneg %p131
        %p346 = pneg %p128
        %p347 = pneg %p152
        %p348 = pneg %p149
        %p349 = pneg %p173
        %p350 = pneg %p170
        %p351 = pneg %p199
        %p352 = pneg %p196
        %s353 = sand.u32 %s186, 1
        %s354 = scalar_lea.sflag [#allocation4], %s353
        %s355 = sand.u32 %s186, 1
        %s356 = smul.addr %s355, 64
        %s357 = scalar_lea.vmem [#allocation10], %s356
        %s358 = smul.u32 16, %s26
        %s359 = ssub.s32 17, %s358
        %p360 = scmp.lt.s32.totalorder %s359, 16
        %s361 = scalar_select %p360, %s359, 16
        %s362 = smul.u32 8, %s361
        %s363 = smul.u32 %s362, 2
        %s364 = smul.u32 16, %s26
        %s365 = ssub.s32 17, %s364
        %p366 = scmp.lt.s32.totalorder %s365, 16
        %s367 = scalar_select %p366, %s365, 16
        %s368 = smul.u32 4, %s367
        %v369 = vld [vmem:[%s311] sm:$0xff]
        %v370 = vld [vmem:[%s311 + $0x8] sm:$0xff]
        %v371 = vld [vmem:[%s311 + $0x10] sm:$0xff]
        %v372 = vld [vmem:[%s311 + $0x18] sm:$0xff]
        %v373 = vld [vmem:[%s311 + $0x20] sm:$0xff]
        %v374 = vld [vmem:[%s311 + $0x28] sm:$0xff]
        %v375 = vld [vmem:[%s311 + $0x30] sm:$0xff]
        %v376 = vld [vmem:[%s311 + $0x38] sm:$0xff]
        %v377 = vld [vmem:[%s311 + $0x40] sm:$0xff]
        %v378 = vld [vmem:[%s311 + $0x48] sm:$0xff]
        %v379 = vld [vmem:[%s311 + $0x50] sm:$0xff]
        %v380 = vld [vmem:[%s311 + $0x58] sm:$0xff]
        %v381 = vld [vmem:[%s311 + $0x60] sm:$0xff]
        %v382 = vld [vmem:[%s311 + $0x68] sm:$0xff]
        %v383 = vld [vmem:[%s311 + $0x70] sm:$0xff]
        %v384 = vld [vmem:[%s311 + $0x78] sm:$0xff]
        %v385 = vld [vmem:[%s311 + $0x80] sm:$0xff]
        %v386 = vld [vmem:[%s311 + $0x88] sm:$0xff]
        %v387 = vld [vmem:[%s311 + $0x90] sm:$0xff]
        %v388 = vld [vmem:[%s311 + $0x98] sm:$0xff]
        %v389 = vld [vmem:[%s311 + $0xa0] sm:$0xff]
        %v390 = vld [vmem:[%s311 + $0xa8] sm:$0xff]
        %v391 = vld [vmem:[%s311 + $0xb0] sm:$0xff]
        %v392 = vld [vmem:[%s311 + $0xb8] sm:$0xff]
        %v393 = vld [vmem:[%s311 + $0xc0] sm:$0xff]
        %v394 = vld [vmem:[%s311 + $0xc8] sm:$0xff]
        %v395 = vld [vmem:[%s311 + $0xd0] sm:$0xff]
        %v396 = vld [vmem:[%s311 + $0xd8] sm:$0xff]
        %v397 = vld [vmem:[%s311 + $0xe0] sm:$0xff]
        %v398 = vld [vmem:[%s311 + $0xe8] sm:$0xff]
        %v399 = vld [vmem:[%s311 + $0xf0] sm:$0xff]
        %v400 = vld [vmem:[%s311 + $0xf8] sm:$0xff]
        %v401 = vpack.c.bf16 %v371, %v369
        %v402 = vpack.c.bf16 %v372, %v370
        %v403 = vpack.c.bf16 %v375, %v373
        %v404 = vpack.c.bf16 %v376, %v374
        %v405 = vpack.c.bf16 %v379, %v377
        %v406 = vpack.c.bf16 %v380, %v378
        %v407 = vpack.c.bf16 %v383, %v381
        %v408 = vpack.c.bf16 %v384, %v382
        %v409 = vpack.c.bf16 %v387, %v385
        %v410 = vpack.c.bf16 %v388, %v386
        %v411 = vpack.c.bf16 %v391, %v389
        %v412 = vpack.c.bf16 %v392, %v390
        %v413 = vpack.c.bf16 %v395, %v393
        %v414 = vpack.c.bf16 %v396, %v394
        %v415 = vpack.c.bf16 %v399, %v397
        %v416 = vpack.c.bf16 %v400, %v398
        %v417 = vld [vmem:[#allocation5] sm:$0xf]
        %v418 = vld [vmem:[#allocation5 + $0x4] sm:$0xf]
        %v419 = vld [vmem:[#allocation5 + $0x8] sm:$0xf]
        %v420 = vld [vmem:[#allocation5 + $0xc] sm:$0xf]
        %v421 = vld [vmem:[#allocation5 + $0x10] sm:$0xf]
        %v422 = vld [vmem:[#allocation5 + $0x14] sm:$0xf]
        %v423 = vld [vmem:[#allocation5 + $0x18] sm:$0xf]
        %v424 = vld [vmem:[#allocation5 + $0x1c] sm:$0xf]
        %v425 = vld [vmem:[#allocation5 + $0x20] sm:$0xf]
        %v426 = vld [vmem:[#allocation5 + $0x24] sm:$0xf]
        %v427 = vld [vmem:[#allocation5 + $0x28] sm:$0xf]
        %v428 = vld [vmem:[#allocation5 + $0x2c] sm:$0xf]
        %v429 = vld [vmem:[#allocation5 + $0x30] sm:$0xf]
        %v430 = vld [vmem:[#allocation5 + $0x34] sm:$0xf]
        %v431 = vld [vmem:[#allocation5 + $0x38] sm:$0xf]
        %v432 = vld [vmem:[#allocation5 + $0x3c] sm:$0xf]
        %v433 = vld [vmem:[#allocation5 + $0x40] sm:$0xf]
        %v434 = vld [vmem:[#allocation5 + $0x44] sm:$0xf]
        %v435 = vld [vmem:[#allocation5 + $0x48] sm:$0xf]
        %v436 = vld [vmem:[#allocation5 + $0x4c] sm:$0xf]
        %v437 = vld [vmem:[#allocation5 + $0x50] sm:$0xf]
        %v438 = vld [vmem:[#allocation5 + $0x54] sm:$0xf]
        %v439 = vld [vmem:[#allocation5 + $0x58] sm:$0xf]
        %v440 = vld [vmem:[#allocation5 + $0x5c] sm:$0xf]
        %v441 = vld [vmem:[#allocation5 + $0x60] sm:$0xf]
        %v442 = vld [vmem:[#allocation5 + $0x64] sm:$0xf]
        %v443 = vld [vmem:[#allocation5 + $0x68] sm:$0xf]
        %v444 = vld [vmem:[#allocation5 + $0x6c] sm:$0xf]
        %v445 = vld [vmem:[#allocation5 + $0x70] sm:$0xf]
        %v446 = vld [vmem:[#allocation5 + $0x74] sm:$0xf]
        %v447 = vld [vmem:[#allocation5 + $0x78] sm:$0xf]
        %v448 = vld [vmem:[#allocation5 + $0x7c] sm:$0xf]
        %v449 = vld [vmem:[%s2] sm:$0x1]
        %v451 = vperm.slane %v449, 0
        %v485 = vunpack.c.l.b16 %v417
        %v486 = vunpack.c.l.b16 %v418
        %v487 = vunpack.c.l.b16 %v419
        %v488 = vunpack.c.l.b16 %v420
        %v489 = vunpack.c.l.b16 %v421
        %v490 = vunpack.c.l.b16 %v422
        %v491 = vunpack.c.l.b16 %v423
        %v492 = vunpack.c.l.b16 %v424
        %v493 = vunpack.c.l.b16 %v425
        %v494 = vunpack.c.l.b16 %v426
        %v495 = vunpack.c.l.b16 %v427
        %v496 = vunpack.c.l.b16 %v428
        %v497 = vunpack.c.l.b16 %v429
        %v498 = vunpack.c.l.b16 %v430
        %v499 = vunpack.c.l.b16 %v431
        %v500 = vunpack.c.l.b16 %v432
        %v501 = vunpack.c.l.b16 %v433
        %v502 = vunpack.c.l.b16 %v434
        %v503 = vunpack.c.l.b16 %v435
        %v504 = vunpack.c.l.b16 %v436
        %v505 = vunpack.c.l.b16 %v437
        %v506 = vunpack.c.l.b16 %v438
        %v507 = vunpack.c.l.b16 %v439
        %v508 = vunpack.c.l.b16 %v440
        %v509 = vunpack.c.l.b16 %v441
        %v510 = vunpack.c.l.b16 %v442
        %v511 = vunpack.c.l.b16 %v443
        %v512 = vunpack.c.l.b16 %v444
        %v513 = vunpack.c.l.b16 %v445
        %v514 = vunpack.c.l.b16 %v446
        %v515 = vunpack.c.l.b16 %v447
        %v516 = vunpack.c.l.b16 %v448
        %v517 = vpack.c.b16 %v486, %v485
        %v518 = vpack.c.b16 %v488, %v487
        %v519 = vpack.c.b16 %v490, %v489
        %v520 = vpack.c.b16 %v492, %v491
        %v521 = vpack.c.b16 %v494, %v493
        %v522 = vpack.c.b16 %v496, %v495
        %v523 = vpack.c.b16 %v498, %v497
        %v524 = vpack.c.b16 %v500, %v499
        %v525 = vpack.c.b16 %v502, %v501
        %v526 = vpack.c.b16 %v504, %v503
        %v527 = vpack.c.b16 %v506, %v505
        %v528 = vpack.c.b16 %v508, %v507
        %v529 = vpack.c.b16 %v510, %v509
        %v530 = vpack.c.b16 %v512, %v511
        %v531 = vpack.c.b16 %v514, %v513
        %v532 = vpack.c.b16 %v516, %v515
        %549 = vmatpush.bf16.msra.mxu0 %v524
        %550 = vmatpush.bf16.msra.mxu0 %v523
        %551 = vmatpush.bf16.msra.mxu0 %v522
        %552 = vmatpush.bf16.msra.mxu0 %v521
        %553 = vmatpush.bf16.msra.mxu0 %v520
        %554 = vmatpush.bf16.msra.mxu0 %v519
        %555 = vmatpush.bf16.msra.mxu0 %v518
        %556 = vmatpush.bf16.msra.mxu0 %v517
        %557 = vmatmul.bf16.gmra.mxu0 %v401
        %v558 = vpop.f32.mrf.mxu0
        %v559 = vadd.f32 %v451, %v558
        %v560 = vpop.f32.mrf.mxu0
        %v561 = vadd.f32 %v451, %v560
        %562 = vmatmul.bf16.gmra.mxu0 %v403
        %v563 = vpop.f32.mrf.mxu0
        %v564 = vadd.f32 %v451, %v563
        %v565 = vpop.f32.mrf.mxu0
        %v566 = vadd.f32 %v451, %v565
        %567 = vmatmul.bf16.gmra.mxu0 %v405
        %v568 = vpop.f32.mrf.mxu0
        %v569 = vadd.f32 %v451, %v568
        %v570 = vpop.f32.mrf.mxu0
        %v571 = vadd.f32 %v451, %v570
        %572 = vmatmul.bf16.gmra.mxu0 %v407
        %v573 = vpop.f32.mrf.mxu0
        %v574 = vadd.f32 %v451, %v573
        %v575 = vpop.f32.mrf.mxu0
        %v576 = vadd.f32 %v451, %v575
        %577 = vmatmul.bf16.gmra.mxu0 %v409
        %v578 = vpop.f32.mrf.mxu0
        %v579 = vadd.f32 %v451, %v578
        %v580 = vpop.f32.mrf.mxu0
        %v581 = vadd.f32 %v451, %v580
        %582 = vmatmul.bf16.gmra.mxu0 %v411
        %v583 = vpop.f32.mrf.mxu0
        %v584 = vadd.f32 %v451, %v583
        %v585 = vpop.f32.mrf.mxu0
        %v586 = vadd.f32 %v451, %v585
        %587 = vmatmul.bf16.gmra.mxu0 %v413
        %v588 = vpop.f32.mrf.mxu0
        %v589 = vadd.f32 %v451, %v588
        %v590 = vpop.f32.mrf.mxu0
        %v591 = vadd.f32 %v451, %v590
        %592 = vmatmul.bf16.gmra.mxu0 %v415
        %v593 = vpop.f32.mrf.mxu0
        %v594 = vadd.f32 %v451, %v593
        %v595 = vpop.f32.mrf.mxu0
        %v596 = vadd.f32 %v451, %v595
        %597 = vdwg.mxu0
        %598 = vmatpush.bf16.msra.mxu0 %v532
        %599 = vmatpush.bf16.msra.mxu0 %v531
        %600 = vmatpush.bf16.msra.mxu0 %v530
        %601 = vmatpush.bf16.msra.mxu0 %v529
        %602 = vmatpush.bf16.msra.mxu0 %v528
        %603 = vmatpush.bf16.msra.mxu0 %v527
        %604 = vmatpush.bf16.msra.mxu0 %v526
        %605 = vmatpush.bf16.msra.mxu0 %v525
        %606 = vmatmul.bf16.gmra.mxu0 %v402
        %v607 = vpop.f32.mrf.mxu0
        %v608 = vadd.f32 %v559, %v607
        %v609 = vpop.f32.mrf.mxu0
        %v610 = vadd.f32 %v561, %v609
        %611 = vmatmul.bf16.gmra.mxu0 %v404
        %v612 = vpop.f32.mrf.mxu0
        %v613 = vadd.f32 %v564, %v612
        %v614 = vpop.f32.mrf.mxu0
        %v615 = vadd.f32 %v566, %v614
        %616 = vmatmul.bf16.gmra.mxu0 %v406
        %v617 = vpop.f32.mrf.mxu0
        %v618 = vadd.f32 %v569, %v617
        %v619 = vpop.f32.mrf.mxu0
        %v620 = vadd.f32 %v571, %v619
        %621 = vmatmul.bf16.gmra.mxu0 %v408
        %v622 = vpop.f32.mrf.mxu0
        %v623 = vadd.f32 %v574, %v622
        %v624 = vpop.f32.mrf.mxu0
        %v625 = vadd.f32 %v576, %v624
        %626 = vmatmul.bf16.gmra.mxu0 %v410
        %v627 = vpop.f32.mrf.mxu0
        %v628 = vadd.f32 %v579, %v627
        %v629 = vpop.f32.mrf.mxu0
        %v630 = vadd.f32 %v581, %v629
        %631 = vmatmul.bf16.gmra.mxu0 %v412
        %v632 = vpop.f32.mrf.mxu0
        %v633 = vadd.f32 %v584, %v632
        %v634 = vpop.f32.mrf.mxu0
        %v635 = vadd.f32 %v586, %v634
        %636 = vmatmul.bf16.gmra.mxu0 %v414
        %v637 = vpop.f32.mrf.mxu0
        %v638 = vadd.f32 %v589, %v637
        %v639 = vpop.f32.mrf.mxu0
        %v640 = vadd.f32 %v591, %v639
        %641 = vmatmul.bf16.gmra.mxu0 %v416
        %v642 = vpop.f32.mrf.mxu0
        %v643 = vadd.f32 %v594, %v642
        %v644 = vpop.f32.mrf.mxu0
        %v645 = vadd.f32 %v596, %v644
        %646 = vdwg.mxu0
        %v647 = vmax.f32 %v608, 0.0
        %v648 = vmax.f32 %v610, 0.0
        %v649 = vmax.f32 %v613, 0.0
        %v650 = vmax.f32 %v615, 0.0
        %v651 = vmax.f32 %v618, 0.0
        %v652 = vmax.f32 %v620, 0.0
        %v653 = vmax.f32 %v623, 0.0
        %v654 = vmax.f32 %v625, 0.0
        %v655 = vmax.f32 %v628, 0.0
        %v656 = vmax.f32 %v630, 0.0
        %v657 = vmax.f32 %v633, 0.0
        %v658 = vmax.f32 %v635, 0.0
        %v659 = vmax.f32 %v638, 0.0
        %v660 = vmax.f32 %v640, 0.0
        %v661 = vmax.f32 %v643, 0.0
        %v662 = vmax.f32 %v645, 0.0
        %v663 = vpack.c.bf16 %v648, %v647
        %v664 = vpack.c.bf16 %v650, %v649
        %v665 = vpack.c.bf16 %v652, %v651
        %v666 = vpack.c.bf16 %v654, %v653
        %v667 = vpack.c.bf16 %v656, %v655
        %v668 = vpack.c.bf16 %v658, %v657
        %v669 = vpack.c.bf16 %v660, %v659
        %v670 = vpack.c.bf16 %v662, %v661
        %v671 = vld [vmem:[#allocation7] sm:$0xf]
        %v672 = vld [vmem:[#allocation7 + $0x4] sm:$0xf]
        %v673 = vld [vmem:[#allocation7 + $0x8] sm:$0xf]
        %v674 = vld [vmem:[#allocation7 + $0xc] sm:$0xf]
        %v675 = vld [vmem:[#allocation7 + $0x10] sm:$0xf]
        %v676 = vld [vmem:[#allocation7 + $0x14] sm:$0xf]
        %v677 = vld [vmem:[#allocation7 + $0x18] sm:$0xf]
        %v678 = vld [vmem:[#allocation7 + $0x1c] sm:$0xf]
        %v679 = vld [vmem:[#allocation7 + $0x20] sm:$0xf]
        %v680 = vld [vmem:[#allocation7 + $0x24] sm:$0xf]
        %v681 = vld [vmem:[#allocation7 + $0x28] sm:$0xf]
        %v682 = vld [vmem:[#allocation7 + $0x2c] sm:$0xf]
        %v683 = vld [vmem:[#allocation7 + $0x30] sm:$0xf]
        %v684 = vld [vmem:[#allocation7 + $0x34] sm:$0xf]
        %v685 = vld [vmem:[#allocation7 + $0x38] sm:$0xf]
        %v686 = vld [vmem:[#allocation7 + $0x3c] sm:$0xf]
        %v687 = vld [vmem:[%s4] sm:$0x1]
        %v689 = vperm.slane %v687, 0
        %v707 = vunpack.c.l.b16 %v671
        %v708 = vunpack.c.l.b16 %v672
        %v709 = vunpack.c.l.b16 %v673
        %v710 = vunpack.c.l.b16 %v674
        %v711 = vunpack.c.l.b16 %v675
        %v712 = vunpack.c.l.b16 %v676
        %v713 = vunpack.c.l.b16 %v677
        %v714 = vunpack.c.l.b16 %v678
        %v715 = vunpack.c.l.b16 %v679
        %v716 = vunpack.c.l.b16 %v680
        %v717 = vunpack.c.l.b16 %v681
        %v718 = vunpack.c.l.b16 %v682
        %v719 = vunpack.c.l.b16 %v683
        %v720 = vunpack.c.l.b16 %v684
        %v721 = vunpack.c.l.b16 %v685
        %v722 = vunpack.c.l.b16 %v686
        %v723 = vpack.c.b16 %v708, %v707
        %v724 = vpack.c.b16 %v710, %v709
        %v725 = vpack.c.b16 %v712, %v711
        %v726 = vpack.c.b16 %v714, %v713
        %v727 = vpack.c.b16 %v716, %v715
        %v728 = vpack.c.b16 %v718, %v717
        %v729 = vpack.c.b16 %v720, %v719
        %v730 = vpack.c.b16 %v722, %v721
        %739 = vmatpush.bf16.msra.mxu0 %v730
        %740 = vmatpush.bf16.msra.mxu0 %v729
        %741 = vmatpush.bf16.msra.mxu0 %v728
        %742 = vmatpush.bf16.msra.mxu0 %v727
        %743 = vmatpush.bf16.msra.mxu0 %v726
        %744 = vmatpush.bf16.msra.mxu0 %v725
        %745 = vmatpush.bf16.msra.mxu0 %v724
        %746 = vmatpush.bf16.msra.mxu0 %v723
        %747 = vmatmul.bf16.gmra.mxu0 %v663
        %v748 = vpop.f32.mrf.mxu0
        %v749 = vadd.f32 %v689, %v748
        %v750 = vpop.f32.mrf.mxu0
        %v751 = vadd.f32 %v689, %v750
        %752 = vmatmul.bf16.gmra.mxu0 %v664
        %v753 = vpop.f32.mrf.mxu0
        %v754 = vadd.f32 %v689, %v753
        %v755 = vpop.f32.mrf.mxu0
        %v756 = vadd.f32 %v689, %v755
        %757 = vmatmul.bf16.gmra.mxu0 %v665
        %v758 = vpop.f32.mrf.mxu0
        %v759 = vadd.f32 %v689, %v758
        %v760 = vpop.f32.mrf.mxu0
        %v761 = vadd.f32 %v689, %v760
        %762 = vmatmul.bf16.gmra.mxu0 %v666
        %v763 = vpop.f32.mrf.mxu0
        %v764 = vadd.f32 %v689, %v763
        %v765 = vpop.f32.mrf.mxu0
        %v766 = vadd.f32 %v689, %v765
        %767 = vmatmul.bf16.gmra.mxu0 %v667
        %v768 = vpop.f32.mrf.mxu0
        %v769 = vadd.f32 %v689, %v768
        %v770 = vpop.f32.mrf.mxu0
        %v771 = vadd.f32 %v689, %v770
        %772 = vmatmul.bf16.gmra.mxu0 %v668
        %v773 = vpop.f32.mrf.mxu0
        %v774 = vadd.f32 %v689, %v773
        %v775 = vpop.f32.mrf.mxu0
        %v776 = vadd.f32 %v689, %v775
        %777 = vmatmul.bf16.gmra.mxu0 %v669
        %v778 = vpop.f32.mrf.mxu0
        %v779 = vadd.f32 %v689, %v778
        %v780 = vpop.f32.mrf.mxu0
        %v781 = vadd.f32 %v689, %v780
        %782 = vmatmul.bf16.gmra.mxu0 %v670
        %v783 = vpop.f32.mrf.mxu0
        %v784 = vadd.f32 %v689, %v783
        %v785 = vpop.f32.mrf.mxu0
        %v786 = vadd.f32 %v689, %v785
        %787 = vdwg.mxu0
        %v788 = vmax.f32 %v749, 0.0
        %v789 = vmax.f32 %v751, 0.0
        %v790 = vmax.f32 %v754, 0.0
        %v791 = vmax.f32 %v756, 0.0
        %v792 = vmax.f32 %v759, 0.0
        %v793 = vmax.f32 %v761, 0.0
        %v794 = vmax.f32 %v764, 0.0
        %v795 = vmax.f32 %v766, 0.0
        %v796 = vmax.f32 %v769, 0.0
        %v797 = vmax.f32 %v771, 0.0
        %v798 = vmax.f32 %v774, 0.0
        %v799 = vmax.f32 %v776, 0.0
        %v800 = vmax.f32 %v779, 0.0
        %v801 = vmax.f32 %v781, 0.0
        %v802 = vmax.f32 %v784, 0.0
        %v803 = vmax.f32 %v786, 0.0
        %v804 = vpack.c.bf16 %v789, %v788
        %v805 = vpack.c.bf16 %v791, %v790
        %v806 = vpack.c.bf16 %v793, %v792
        %v807 = vpack.c.bf16 %v795, %v794
        %v808 = vpack.c.bf16 %v797, %v796
        %v809 = vpack.c.bf16 %v799, %v798
        %v810 = vpack.c.bf16 %v801, %v800
        %v811 = vpack.c.bf16 %v803, %v802
        %v812 = vld [vmem:[#allocation8] sm:$0xf]
        %v813 = vld [vmem:[#allocation8 + $0x4] sm:$0xf]
        %v814 = vld [vmem:[#allocation8 + $0x8] sm:$0xf]
        %v815 = vld [vmem:[#allocation8 + $0xc] sm:$0xf]
        %v816 = vld [vmem:[#allocation8 + $0x10] sm:$0xf]
        %v817 = vld [vmem:[#allocation8 + $0x14] sm:$0xf]
        %v818 = vld [vmem:[#allocation8 + $0x18] sm:$0xf]
        %v819 = vld [vmem:[#allocation8 + $0x1c] sm:$0xf]
        %v820 = vld [vmem:[#allocation8 + $0x20] sm:$0xf]
        %v821 = vld [vmem:[#allocation8 + $0x24] sm:$0xf]
        %v822 = vld [vmem:[#allocation8 + $0x28] sm:$0xf]
        %v823 = vld [vmem:[#allocation8 + $0x2c] sm:$0xf]
        %v824 = vld [vmem:[#allocation8 + $0x30] sm:$0xf]
        %v825 = vld [vmem:[#allocation8 + $0x34] sm:$0xf]
        %v826 = vld [vmem:[#allocation8 + $0x38] sm:$0xf]
        %v827 = vld [vmem:[#allocation8 + $0x3c] sm:$0xf]
        %v828 = vld [vmem:[%s6] sm:$0x1]
        %v830 = vperm.slane %v828, 0
        %v848 = vunpack.c.l.b16 %v812
        %v849 = vunpack.c.l.b16 %v813
        %v850 = vunpack.c.l.b16 %v814
        %v851 = vunpack.c.l.b16 %v815
        %v852 = vunpack.c.l.b16 %v816
        %v853 = vunpack.c.l.b16 %v817
        %v854 = vunpack.c.l.b16 %v818
        %v855 = vunpack.c.l.b16 %v819
        %v856 = vunpack.c.l.b16 %v820
        %v857 = vunpack.c.l.b16 %v821
        %v858 = vunpack.c.l.b16 %v822
        %v859 = vunpack.c.l.b16 %v823
        %v860 = vunpack.c.l.b16 %v824
        %v861 = vunpack.c.l.b16 %v825
        %v862 = vunpack.c.l.b16 %v826
        %v863 = vunpack.c.l.b16 %v827
        %v864 = vpack.c.b16 %v849, %v848
        %v865 = vpack.c.b16 %v851, %v850
        %v866 = vpack.c.b16 %v853, %v852
        %v867 = vpack.c.b16 %v855, %v854
        %v868 = vpack.c.b16 %v857, %v856
        %v869 = vpack.c.b16 %v859, %v858
        %v870 = vpack.c.b16 %v861, %v860
        %v871 = vpack.c.b16 %v863, %v862
        %880 = vmatpush.bf16.msra.mxu0 %v871
        %881 = vmatpush.bf16.msra.mxu0 %v870
        %882 = vmatpush.bf16.msra.mxu0 %v869
        %883 = vmatpush.bf16.msra.mxu0 %v868
        %884 = vmatpush.bf16.msra.mxu0 %v867
        %885 = vmatpush.bf16.msra.mxu0 %v866
        %886 = vmatpush.bf16.msra.mxu0 %v865
        %887 = vmatpush.bf16.msra.mxu0 %v864
        %888 = vmatmul.bf16.gmra.mxu0 %v804
        %v889 = vpop.f32.mrf.mxu0
        %v890 = vadd.f32 %v830, %v889
        %v891 = vpop.f32.mrf.mxu0
        %v892 = vadd.f32 %v830, %v891
        %893 = vmatmul.bf16.gmra.mxu0 %v805
        %v894 = vpop.f32.mrf.mxu0
        %v895 = vadd.f32 %v830, %v894
        %v896 = vpop.f32.mrf.mxu0
        %v897 = vadd.f32 %v830, %v896
        %898 = vmatmul.bf16.gmra.mxu0 %v806
        %v899 = vpop.f32.mrf.mxu0
        %v900 = vadd.f32 %v830, %v899
        %v901 = vpop.f32.mrf.mxu0
        %v902 = vadd.f32 %v830, %v901
        %903 = vmatmul.bf16.gmra.mxu0 %v807
        %v904 = vpop.f32.mrf.mxu0
        %v905 = vadd.f32 %v830, %v904
        %v906 = vpop.f32.mrf.mxu0
        %v907 = vadd.f32 %v830, %v906
        %908 = vmatmul.bf16.gmra.mxu0 %v808
        %v909 = vpop.f32.mrf.mxu0
        %v910 = vadd.f32 %v830, %v909
        %v911 = vpop.f32.mrf.mxu0
        %v912 = vadd.f32 %v830, %v911
        %913 = vmatmul.bf16.gmra.mxu0 %v809
        %v914 = vpop.f32.mrf.mxu0
        %v915 = vadd.f32 %v830, %v914
        %v916 = vpop.f32.mrf.mxu0
        %v917 = vadd.f32 %v830, %v916
        %918 = vmatmul.bf16.gmra.mxu0 %v810
        %v919 = vpop.f32.mrf.mxu0
        %v920 = vadd.f32 %v830, %v919
        %v921 = vpop.f32.mrf.mxu0
        %v922 = vadd.f32 %v830, %v921
        %923 = vmatmul.bf16.gmra.mxu0 %v811
        %v924 = vpop.f32.mrf.mxu0
        %v925 = vadd.f32 %v830, %v924
        %v926 = vpop.f32.mrf.mxu0
        %v927 = vadd.f32 %v830, %v926
        %928 = vdwg.mxu0
        %v929 = vpack.c.bf16 %v890, %v890
        %v930 = vpack.c.bf16 %v892, %v892
        %v931 = vpack.c.bf16 %v895, %v895
        %v932 = vpack.c.bf16 %v897, %v897
        %v933 = vpack.c.bf16 %v900, %v900
        %v934 = vpack.c.bf16 %v902, %v902
        %v935 = vpack.c.bf16 %v905, %v905
        %v936 = vpack.c.bf16 %v907, %v907
        %v937 = vpack.c.bf16 %v910, %v910
        %v938 = vpack.c.bf16 %v912, %v912
        %v939 = vpack.c.bf16 %v915, %v915
        %v940 = vpack.c.bf16 %v917, %v917
        %v941 = vpack.c.bf16 %v920, %v920
        %v942 = vpack.c.bf16 %v922, %v922
        %v943 = vpack.c.bf16 %v925, %v925
        %v944 = vpack.c.bf16 %v927, %v927
        %945 = vst [vmem:[%s357] sm:$0xf] %v929
        %946 = vst [vmem:[%s357 + $0x4] sm:$0xf] %v930
        %947 = vst [vmem:[%s357 + $0x8] sm:$0xf] %v931
        %948 = vst [vmem:[%s357 + $0xc] sm:$0xf] %v932
        %949 = vst [vmem:[%s357 + $0x10] sm:$0xf] %v933
        %950 = vst [vmem:[%s357 + $0x14] sm:$0xf] %v934
        %951 = vst [vmem:[%s357 + $0x18] sm:$0xf] %v935
        %952 = vst [vmem:[%s357 + $0x1c] sm:$0xf] %v936
        %953 = vst [vmem:[%s357 + $0x20] sm:$0xf] %v937
        %954 = vst [vmem:[%s357 + $0x24] sm:$0xf] %v938
        %955 = vst [vmem:[%s357 + $0x28] sm:$0xf] %v939
        %956 = vst [vmem:[%s357 + $0x2c] sm:$0xf] %v940
        %957 = vst [vmem:[%s357 + $0x30] sm:$0xf] %v941
        %958 = vst [vmem:[%s357 + $0x34] sm:$0xf] %v942
        %959 = vst [vmem:[%s357 + $0x38] sm:$0xf] %v943
        %960 = vst [vmem:[%s357 + $0x3c] sm:$0xf] %v944
        %s961 = sand.u32 %s186, 1
        %s962 = scalar_lea.sflag [#allocation4], %s961
        %s963 = sand.u32 %s186, 1
        %s964 = smul.addr %s963, 64
        %s965 = scalar_lea.vmem [#allocation10], %s964
        // Predicated region
        $region65: #{tpu_custom_call.1} parent=47 // pred_check
          %p966 = pneg %p196
        $region66: #{tpu_custom_call.1} parent=47 // pred_check_branch
          %968 = sbr.rel (%p966) target = $region68
        $region67: #{tpu_custom_call.1} parent=47 // pred_region
          %s969 = smul.u32 16, %s26
          %s970 = ssub.s32 17, %s969
          %p971 = scmp.lt.s32.totalorder %s970, 16
          %s972 = scalar_select %p971, %s970, 16
          %s973 = smul.u32 4, %s972
          %s974 = ssub.s32 64, %s973
          %s975 = sshll.u32 %s974, 4
          %976 = vsyncadd %s962, %s975
          %p977 = scmp.ne.s32.totalorder 0, %s973
          %s978 = smul.addr %s969, 4
          %s979 = scalar_lea.hbm %s7, %s978
          %s980 = smul.u32 4, %s972
          %s981 = sshll.u32 %s965, 4
          %s982 = int_to_ptr.vmem [resolvable:$true] %s981
          %s983 = sshll.u32 %s979, 4
          %s984 = int_to_ptr.hbm [resolvable:$true] %s983
          %s985 = sshll.u32 %s980, 4
          %989 = dma.vmem_to_hbm [thread:$0]  (%p977), %s982, %s985, %s984, %s962, 64, 64, 4
        $region68: #{tpu_custom_call.1} parent=47 // pred_fallthru
          _
      $region48: #{tpu_custom_call.1} parent=5 // pred_fallthru
        _
      %p990 = scmp.le.s32.totalorder 2, %s21
      // Predicated region
      $region69: #{tpu_custom_call.1} parent=5 // pred_check
        %p991 = pneg %p990
      $region70: #{tpu_custom_call.1} parent=5 // pred_check_branch
        %993 = sbr.rel (%p991) target = $region72
      $region71: #{tpu_custom_call.1} parent=5 // pred_region
        %s994 = ssub.s32 %s21, 2
        // Predicated region
        $region73: #{tpu_custom_call.1} parent=71 // pred_check
          %p995 = pneg %p202
        $region74: #{tpu_custom_call.1} parent=71 // pred_check_branch
          %997 = sbr.rel (%p995) target = $region76
        $region75: #{tpu_custom_call.1} parent=71 // pred_region
          %s998 = sand.u32 %s187, 1
          %s999 = scalar_lea.sflag [#allocation4], %s998
          %s1000 = sand.u32 %s187, 1
          %s1001 = smul.addr %s1000, 64
          %s1002 = scalar_lea.vmem [#allocation10], %s1001
          %1004 = dma.done %s999, 1024
        $region76: #{tpu_custom_call.1} parent=71 // pred_fallthru
          _
      $region72: #{tpu_custom_call.1} parent=5 // pred_fallthru
        _
    $region6: #{tpu_custom_call.1} parent=1 // loop_footer
      %s25 = sadd.s32 1, %s21
    $region7: #{tpu_custom_call.1} parent=1 // loop_footer_branch
      %20 = sbr.rel target = $region3
    $region8: #{tpu_custom_call.1} parent=1 // loop_exit
      _
    %1005 = vsyncpa [#allocation3], 1
    %s1006 = scalar_lea.sflag [#allocation3], 1
    %1007 = vsyncpa %s1006, 1
    %1008 = vsyncpa [#allocation6], 1
    %1009 = vsyncpa [#allocation9], 1
    %1010 = vsyncpa [#allocation4], 1
    %s1011 = scalar_lea.sflag [#allocation4], 1
    %1012 = vsyncpa %s1011, 1

// kernel: tpu_custom_call.1
$region0: #{tpu_custom_call.1}
  #allocation0 [shape = 'u32[]', space=smem, size = 0x4, offset = 0x4, fixed_abs, tag = 'smem constant byte address 0x4 - core index']
  #allocation1 [shape = 'u32[72,128]{1,0:T(1,128)}', space=vmem, size = 0x9000, scoped, tag = 'internal scratch']
  %s0 = inlined_call_operand.hbm [shape: f32[130,256], index: 0, kind: input, shape index: {}]
  %s1 = inlined_call_operand.hbm [shape: bf16[256,128], index: 1, kind: input, shape index: {}]
  %s2 = inlined_call_operand.vmem [shape: f32[1,128], index: 2, kind: input, shape index: {}]
  %s3 = inlined_call_operand.hbm [shape: bf16[128,128], index: 3, kind: input, shape index: {}]
  %s4 = inlined_call_operand.vmem [shape: f32[1,128], index: 4, kind: input, shape index: {}]
  %s5 = inlined_call_operand.hbm [shape: bf16[128,128], index: 5, kind: input, shape index: {}]
  %s6 = inlined_call_operand.vmem [shape: f32[1,128], index: 6, kind: input, shape index: {}]
  %s7 = inlined_call_operand.hbm [shape: bf16[130,128], index: 7, kind: output, shape index: {}]
  %s8 = sld [smem:[#allocation0]]
  $region77: #{tpu_custom_call.1} parent=0
    _
  %s10 = ssub.s32 1, %s8
  %s11 = scalar_select 0, %s10, %s8
  $region1: #{tpu_custom_call.1} parent=0
    #allocation2 [shape = 'u8[262144]{0}', space=vmem, size = 0x40000, scoped, tag = 'input window, operand 0']
    #allocation3 [shape = 's32[2]{0}', space=sflag, size = 0x8, scoped, tag = 'scoped memory for tpu_custom_call.1']
    #allocation4 [shape = 's32[2]{0}', space=sflag, size = 0x8, scoped, tag = 'scoped memory for tpu_custom_call.1']
    #allocation5 [shape = 'u8[65536]{0}', space=vmem, size = 0x10000, scoped, tag = 'input window, operand 1, single buffered']
    #allocation6 [shape = 's32[1]{0}', space=sflag, size = 0x4, scoped, tag = 'scoped memory for tpu_custom_call.1']
    #allocation7 [shape = 'u8[32768]{0}', space=vmem, size = 0x8000, scoped, tag = 'input window, operand 3, single buffered']
    #allocation8 [shape = 'u8[32768]{0}', space=vmem, size = 0x8000, scoped, tag = 'input window, operand 5, single buffered']
    #allocation9 [shape = 's32[1]{0}', space=sflag, size = 0x4, scoped, tag = 'scoped memory for tpu_custom_call.1']
    #allocation10 [shape = 'u8[65536]{0}', space=vmem, size = 0x10000, scoped, tag = 'output window, operand 0']
    %12 = vsyncpa [#allocation3], 0
    %s13 = scalar_lea.sflag [#allocation3], 1
    %14 = vsyncpa %s13, 0
    %15 = vsyncpa [#allocation6], 0
    %16 = vsyncpa [#allocation9], 0
    %17 = vsyncpa [#allocation4], 0
    %s18 = scalar_lea.sflag [#allocation4], 1
    %19 = vsyncpa %s18, 0
    loop: start=0, step=1, limit=4
    $region2: #{tpu_custom_call.1} parent=1 // loop_pre_header
      _
    $region3: #{tpu_custom_call.1} parent=1 // loop_header
      %s21 = sphi 0, %s25
      %p22 = scmp.ge.s32.totalorder %s21, 4
      %s31 = sphi 0, %s33
      %s34 = sphi 0, %s31
      %s35 = sphi 0, %s34
      %s51 = sphi 0, %s35
      %s55 = sphi 0, %s55
      %s57 = sphi 0, %s55
      %s58 = sphi 0, %s57
      %s72 = sphi 0, %s58
      %s76 = sphi 0, %s76
      %s78 = sphi 0, %s76
      %s79 = sphi 0, %s78
      %s93 = sphi 0, %s79
      %s97 = sphi 0, %s97
      %s99 = sphi 0, %s97
      %s100 = sphi 0, %s99
      %s114 = sphi 0, %s100
      %s118 = sphi 0, %s118
      %s120 = sphi 0, %s118
      %s121 = sphi 0, %s120
      %s135 = sphi 0, %s121
      %s139 = sphi 0, %s139
      %s141 = sphi 0, %s139
      %s142 = sphi 0, %s141
      %s156 = sphi 0, %s142
      %s160 = sphi 0, %s160
      %s162 = sphi 0, %s160
      %s163 = sphi 0, %s162
      %s177 = sphi 0, %s163
      %s183 = sphi 0, %s185
      %s186 = sphi 0, %s183
      %s187 = sphi 0, %s186
      %s203 = sphi 0, %s187
    $region4: #{tpu_custom_call.1} parent=1 // loop_header_branch
      %24 = sbr.rel (%p22) target = $region8
    $region5: #{tpu_custom_call.1} parent=1 // loop_body
      %s26 = ssub.s32 %s21, 1
      %s27 = ssub.s32 %s21, 2
      %s28 = sadd.s32 %s21, 1
      %s29 = ssub.s32 %s21, %s28
      %p30 = scmp.eq.s32.totalorder %s29, 0
      %s32 = sadd.s32 %s31, 1
      %s33 = scalar_select %p30, %s31, %s32
      %p36 = pneg %p30
      %p37 = scmp.eq.s32.totalorder %s21, 1
      %p38 = por %p36, %p37
      %p39 = scmp.ne.s32.totalorder %s31, %s34
      %p40 = scmp.eq.s32.totalorder %s21, 0
      %p41 = por %p39, %p40
      %p42 = scmp.ne.s32.totalorder %s31, %s34
      %p43 = scmp.eq.s32.totalorder %s26, 1
      %p44 = por %p42, %p43
      %p45 = scmp.ne.s32.totalorder %s34, %s35
      %p46 = scmp.eq.s32.totalorder %s26, 0
      %p47 = por %p45, %p46
      %p48 = scmp.ne.s32.totalorder %s34, %s35
      %p49 = scmp.eq.s32.totalorder %s27, 1
      %p50 = por %p48, %p49
      %p52 = scmp.ne.s32.totalorder %s35, %s51
      %p53 = scmp.eq.s32.totalorder %s27, 0
      %p54 = por %p52, %p53
      %s56 = sadd.s32 %s55, 1
      %p59 = scmp.eq.s32.totalorder %s21, 1
      %p60 = scmp.ne.s32.totalorder %s55, %s57
      %p61 = scmp.eq.s32.totalorder %s21, 0
      %p62 = por %p60, %p61
      %p63 = scmp.ne.s32.totalorder %s55, %s57
      %p64 = scmp.eq.s32.totalorder %s26, 1
      %p65 = por %p63, %p64
      %p66 = scmp.ne.s32.totalorder %s57, %s58
      %p67 = scmp.eq.s32.totalorder %s26, 0
      %p68 = por %p66, %p67
      %p69 = scmp.ne.s32.totalorder %s57, %s58
      %p70 = scmp.eq.s32.totalorder %s27, 1
      %p71 = por %p69, %p70
      %p73 = scmp.ne.s32.totalorder %s58, %s72
      %p74 = scmp.eq.s32.totalorder %s27, 0
      %p75 = por %p73, %p74
      %s77 = sadd.s32 %s76, 1
      %p80 = scmp.eq.s32.totalorder %s21, 1
      %p81 = scmp.ne.s32.totalorder %s76, %s78
      %p82 = scmp.eq.s32.totalorder %s21, 0
      %p83 = por %p81, %p82
      %p84 = scmp.ne.s32.totalorder %s76, %s78
      %p85 = scmp.eq.s32.totalorder %s26, 1
      %p86 = por %p84, %p85
      %p87 = scmp.ne.s32.totalorder %s78, %s79
      %p88 = scmp.eq.s32.totalorder %s26, 0
      %p89 = por %p87, %p88
      %p90 = scmp.ne.s32.totalorder %s78, %s79
      %p91 = scmp.eq.s32.totalorder %s27, 1
      %p92 = por %p90, %p91
      %p94 = scmp.ne.s32.totalorder %s79, %s93
      %p95 = scmp.eq.s32.totalorder %s27, 0
      %p96 = por %p94, %p95
      %s98 = sadd.s32 %s97, 1
      %p101 = scmp.eq.s32.totalorder %s21, 1
      %p102 = scmp.ne.s32.totalorder %s97, %s99
      %p103 = scmp.eq.s32.totalorder %s21, 0
      %p104 = por %p102, %p103
      %p105 = scmp.ne.s32.totalorder %s97, %s99
      %p106 = scmp.eq.s32.totalorder %s26, 1
      %p107 = por %p105, %p106
      %p108 = scmp.ne.s32.totalorder %s99, %s100
      %p109 = scmp.eq.s32.totalorder %s26, 0
      %p110 = por %p108, %p109
      %p111 = scmp.ne.s32.totalorder %s99, %s100
      %p112 = scmp.eq.s32.totalorder %s27, 1
      %p113 = por %p111, %p112
      %p115 = scmp.ne.s32.totalorder %s100, %s114
      %p116 = scmp.eq.s32.totalorder %s27, 0
      %p117 = por %p115, %p116
      %s119 = sadd.s32 %s118, 1
      %p122 = scmp.eq.s32.totalorder %s21, 1
      %p123 = scmp.ne.s32.totalorder %s118, %s120
      %p124 = scmp.eq.s32.totalorder %s21, 0
      %p125 = por %p123, %p124
      %p126 = scmp.ne.s32.totalorder %s118, %s120
      %p127 = scmp.eq.s32.totalorder %s26, 1
      %p128 = por %p126, %p127
      %p129 = scmp.ne.s32.totalorder %s120, %s121
      %p130 = scmp.eq.s32.totalorder %s26, 0
      %p131 = por %p129, %p130
      %p132 = scmp.ne.s32.totalorder %s120, %s121
      %p133 = scmp.eq.s32.totalorder %s27, 1
      %p134 = por %p132, %p133
      %p136 = scmp.ne.s32.totalorder %s121, %s135
      %p137 = scmp.eq.s32.totalorder %s27, 0
      %p138 = por %p136, %p137
      %s140 = sadd.s32 %s139, 1
      %p143 = scmp.eq.s32.totalorder %s21, 1
      %p144 = scmp.ne.s32.totalorder %s139, %s141
      %p145 = scmp.eq.s32.totalorder %s21, 0
      %p146 = por %p144, %p145
      %p147 = scmp.ne.s32.totalorder %s139, %s141
      %p148 = scmp.eq.s32.totalorder %s26, 1
      %p149 = por %p147, %p148
      %p150 = scmp.ne.s32.totalorder %s141, %s142
      %p151 = scmp.eq.s32.totalorder %s26, 0
      %p152 = por %p150, %p151
      %p153 = scmp.ne.s32.totalorder %s141, %s142
      %p154 = scmp.eq.s32.totalorder %s27, 1
      %p155 = por %p153, %p154
      %p157 = scmp.ne.s32.totalorder %s142, %s156
      %p158 = scmp.eq.s32.totalorder %s27, 0
      %p159 = por %p157, %p158
      %s161 = sadd.s32 %s160, 1
      %p164 = scmp.eq.s32.totalorder %s21, 1
      %p165 = scmp.ne.s32.totalorder %s160, %s162
      %p166 = scmp.eq.s32.totalorder %s21, 0
      %p167 = por %p165, %p166
      %p168 = scmp.ne.s32.totalorder %s160, %s162
      %p169 = scmp.eq.s32.totalorder %s26, 1
      %p170 = por %p168, %p169
      %p171 = scmp.ne.s32.totalorder %s162, %s163
      %p172 = scmp.eq.s32.totalorder %s26, 0
      %p173 = por %p171, %p172
      %p174 = scmp.ne.s32.totalorder %s162, %s163
      %p175 = scmp.eq.s32.totalorder %s27, 1
      %p176 = por %p174, %p175
      %p178 = scmp.ne.s32.totalorder %s163, %s177
      %p179 = scmp.eq.s32.totalorder %s27, 0
      %p180 = por %p178, %p179
      %s181 = ssub.s32 %s21, %s28
      %p182 = scmp.eq.s32.totalorder %s181, 0
      %s184 = sadd.s32 %s183, 1
      %s185 = scalar_select %p182, %s183, %s184
      %p188 = pneg %p182
      %p189 = scmp.eq.s32.totalorder %s21, 1
      %p190 = por %p188, %p189
      %p191 = scmp.ne.s32.totalorder %s183, %s186
      %p192 = scmp.eq.s32.totalorder %s21, 0
      %p193 = por %p191, %p192
      %p194 = scmp.ne.s32.totalorder %s183, %s186
      %p195 = scmp.eq.s32.totalorder %s26, 1
      %p196 = por %p194, %p195
      %p197 = scmp.ne.s32.totalorder %s186, %s187
      %p198 = scmp.eq.s32.totalorder %s26, 0
      %p199 = por %p197, %p198
      %p200 = scmp.ne.s32.totalorder %s186, %s187
      %p201 = scmp.eq.s32.totalorder %s27, 1
      %p202 = por %p200, %p201
      %p204 = scmp.ne.s32.totalorder %s187, %s203
      %p205 = scmp.eq.s32.totalorder %s27, 0
      %p206 = por %p204, %p205
      %p207 = scmp.le.s32.totalorder 1, %s21
      %p208 = scmp.lt.s32.totalorder %s21, 3
      %p209 = pnand %p207, %p208
      %p210 = pneg %p209
      // Predicated region
      $region9: #{tpu_custom_call.1} parent=5 // pred_check
        _
      $region10: #{tpu_custom_call.1} parent=5 // pred_check_branch
        %212 = sbr.rel (%p209) target = $region12
      $region11: #{tpu_custom_call.1} parent=5 // pred_region
        %s213 = ssub.s32 %s21, 1
        // Predicated region
        $region13: #{tpu_custom_call.1} parent=11 // pred_check
          %p214 = pneg %p68
        $region14: #{tpu_custom_call.1} parent=11 // pred_check_branch
          %216 = sbr.rel (%p214) target = $region16
        $region15: #{tpu_custom_call.1} parent=11 // pred_region
          %218 = vsyncadd [#allocation6], 0
          %s219 = sshll.u32 %s1, 4
          %s220 = int_to_ptr.hbm [resolvable:$true] %s219
          %s221 = sshll.u32 [#allocation5], 4
          %s222 = int_to_ptr.vmem [resolvable:$true] %s221
          %227 = dma.hbm_to_vmem [thread:$0]  %s220, 2048, %s222, [#allocation6], 64, 64, 4
        $region16: #{tpu_custom_call.1} parent=11 // pred_fallthru
          _
        // Predicated region
        $region17: #{tpu_custom_call.1} parent=11 // pred_check
          %p228 = pneg %p89
        $region18: #{tpu_custom_call.1} parent=11 // pred_check_branch
          %230 = sbr.rel (%p228) target = $region20
        $region19: #{tpu_custom_call.1} parent=11 // pred_region
          _
        $region20: #{tpu_custom_call.1} parent=11 // pred_fallthru
          _
        // Predicated region
        $region21: #{tpu_custom_call.1} parent=11 // pred_check
          %p231 = pneg %p110
        $region22: #{tpu_custom_call.1} parent=11 // pred_check_branch
          %233 = sbr.rel (%p231) target = $region24
        $region23: #{tpu_custom_call.1} parent=11 // pred_region
          %235 = vsyncadd [#allocation6], 0
          %s236 = sshll.u32 %s3, 4
          %s237 = int_to_ptr.hbm [resolvable:$true] %s236
          %s238 = sshll.u32 [#allocation7], 4
          %s239 = int_to_ptr.vmem [resolvable:$true] %s238
          %244 = dma.hbm_to_vmem [thread:$0]  %s237, 1024, %s239, [#allocation6], 64, 64, 4
        $region24: #{tpu_custom_call.1} parent=11 // pred_fallthru
          _
        // Predicated region
        $region25: #{tpu_custom_call.1} parent=11 // pred_check
          %p245 = pneg %p131
        $region26: #{tpu_custom_call.1} parent=11 // pred_check_branch
          %247 = sbr.rel (%p245) target = $region28
        $region27: #{tpu_custom_call.1} parent=11 // pred_region
          _
        $region28: #{tpu_custom_call.1} parent=11 // pred_fallthru
          _
        // Predicated region
        $region29: #{tpu_custom_call.1} parent=11 // pred_check
          %p248 = pneg %p152
        $region30: #{tpu_custom_call.1} parent=11 // pred_check_branch
          %250 = sbr.rel (%p248) target = $region32
        $region31: #{tpu_custom_call.1} parent=11 // pred_region
          %252 = vsyncadd [#allocation9], 0
          %s253 = sshll.u32 %s5, 4
          %s254 = int_to_ptr.hbm [resolvable:$true] %s253
          %s255 = sshll.u32 [#allocation8], 4
          %s256 = int_to_ptr.vmem [resolvable:$true] %s255
          %261 = dma.hbm_to_vmem [thread:$0]  %s254, 1024, %s256, [#allocation9], 64, 64, 4
        $region32: #{tpu_custom_call.1} parent=11 // pred_fallthru
          _
        // Predicated region
        $region33: #{tpu_custom_call.1} parent=11 // pred_check
          %p262 = pneg %p173
        $region34: #{tpu_custom_call.1} parent=11 // pred_check_branch
          %264 = sbr.rel (%p262) target = $region36
        $region35: #{tpu_custom_call.1} parent=11 // pred_region
          _
        $region36: #{tpu_custom_call.1} parent=11 // pred_fallthru
          _
      $region12: #{tpu_custom_call.1} parent=5 // pred_fallthru
        _
      %p265 = scmp.lt.s32.totalorder %s21, 2
      // Predicated region
      $region37: #{tpu_custom_call.1} parent=5 // pred_check
        %p266 = pneg %p265
      $region38: #{tpu_custom_call.1} parent=5 // pred_check_branch
        %268 = sbr.rel (%p266) target = $region40
      $region39: #{tpu_custom_call.1} parent=5 // pred_region
        // Predicated region
        $region41: #{tpu_custom_call.1} parent=39 // pred_check
          %p269 = pneg %p41
        $region42: #{tpu_custom_call.1} parent=39 // pred_check_branch
          %271 = sbr.rel (%p269) target = $region44
        $region43: #{tpu_custom_call.1} parent=39 // pred_region
          %s272 = sand.u32 %s31, 1
          %s273 = scalar_lea.sflag [#allocation3], %s272
          %s274 = sand.u32 %s31, 1
          %s275 = smul.addr %s274, 256
          %s276 = scalar_lea.vmem [#allocation2], %s275
          %s277 = smul.u32 16, %s21
          %s278 = ssub.s32 17, %s277
          %p279 = scmp.lt.s32.totalorder %s278, 16
          %s280 = scalar_select %p279, %s278, 16
          %s281 = smul.u32 8, %s280
          %s282 = smul.u32 %s281, 2
          %s283 = ssub.s32 256, %s282
          %s284 = sshll.u32 %s283, 4
          %285 = vsyncadd %s273, %s284
          %p286 = scmp.ne.s32.totalorder 0, %s282
          %s287 = smul.addr %s277, 2
          %s288 = smul.addr %s287, 8
          %s289 = scalar_lea.hbm %s0, %s288
          %s290 = smul.u32 16, %s280
          %s291 = sshll.u32 %s289, 4
          %s292 = int_to_ptr.hbm [resolvable:$true] %s291
          %s293 = sshll.u32 %s276, 4
          %s294 = int_to_ptr.vmem [resolvable:$true] %s293
          %s295 = sshll.u32 %s290, 4
          %299 = dma.hbm_to_vmem [thread:$0]  (%p286), %s292, %s295, %s294, %s273, 256, 256, 16
        $region44: #{tpu_custom_call.1} parent=39 // pred_fallthru
          _
      $region40: #{tpu_custom_call.1} parent=5 // pred_fallthru
        _
      %p300 = scmp.le.s32.totalorder 1, %s21
      %p301 = scmp.lt.s32.totalorder %s21, 3
      %p302 = pnand %p300, %p301
      %p303 = pneg %p302
      // Predicated region
      $region45: #{tpu_custom_call.1} parent=5 // pred_check
        _
      $region46: #{tpu_custom_call.1} parent=5 // pred_check_branch
        %305 = sbr.rel (%p302) target = $region48
      $region47: #{tpu_custom_call.1} parent=5 // pred_region
        %s306 = ssub.s32 %s21, 1
        %s307 = sand.u32 %s34, 1
        %s308 = scalar_lea.sflag [#allocation3], %s307
        %s309 = sand.u32 %s34, 1
        %s310 = smul.addr %s309, 256
        %s311 = scalar_lea.vmem [#allocation2], %s310
        // Predicated region
        $region49: #{tpu_custom_call.1} parent=47 // pred_check
          %p312 = pneg %p47
        $region50: #{tpu_custom_call.1} parent=47 // pred_check_branch
          %314 = sbr.rel (%p312) target = $region52
        $region51: #{tpu_custom_call.1} parent=47 // pred_region
          %316 = dma.done %s308, 4096
        $region52: #{tpu_custom_call.1} parent=47 // pred_fallthru
          _
        // Predicated region
        $region53: #{tpu_custom_call.1} parent=47 // pred_check
          %p317 = pneg %p68
        $region54: #{tpu_custom_call.1} parent=47 // pred_check_branch
          %319 = sbr.rel (%p317) target = $region56
        $region55: #{tpu_custom_call.1} parent=47 // pred_region
          %321 = dma.done [#allocation6], 2048
        $region56: #{tpu_custom_call.1} parent=47 // pred_fallthru
          _
        // Predicated region
        $region57: #{tpu_custom_call.1} parent=47 // pred_check
          %p322 = pneg %p110
        $region58: #{tpu_custom_call.1} parent=47 // pred_check_branch
          %324 = sbr.rel (%p322) target = $region60
        $region59: #{tpu_custom_call.1} parent=47 // pred_region
          %326 = dma.done [#allocation6], 1024
        $region60: #{tpu_custom_call.1} parent=47 // pred_fallthru
          _
        // Predicated region
        $region61: #{tpu_custom_call.1} parent=47 // pred_check
          %p327 = pneg %p152
        $region62: #{tpu_custom_call.1} parent=47 // pred_check_branch
          %329 = sbr.rel (%p327) target = $region64
        $region63: #{tpu_custom_call.1} parent=47 // pred_region
          %331 = dma.done [#allocation9], 1024
        $region64: #{tpu_custom_call.1} parent=47 // pred_fallthru
          _
        %s332 = sand.u32 %s34, 1
        %s333 = scalar_lea.sflag [#allocation3], %s332
        %s334 = sand.u32 %s34, 1
        %s335 = smul.addr %s334, 256
        %s336 = scalar_lea.vmem [#allocation2], %s335
        %p337 = pneg %p47
        %p338 = pneg %p44
        %p339 = pneg %p68
        %p340 = pneg %p65
        %p341 = pneg %p89
        %p342 = pneg %p86
        %p343 = pneg %p110
        %p344 = pneg %p107
        %p345 = pneg %p131
        %p346 = pneg %p128
        %p347 = pneg %p152
        %p348 = pneg %p149
        %p349 = pneg %p173
        %p350 = pneg %p170
        %p351 = pneg %p199
        %p352 = pneg %p196
        %s353 = sand.u32 %s186, 1
        %s354 = scalar_lea.sflag [#allocation4], %s353
        %s355 = sand.u32 %s186, 1
        %s356 = smul.addr %s355, 64
        %s357 = scalar_lea.vmem [#allocation10], %s356
        %s358 = smul.u32 16, %s26
        %s359 = ssub.s32 17, %s358
        %p360 = scmp.lt.s32.totalorder %s359, 16
        %s361 = scalar_select %p360, %s359, 16
        %s362 = smul.u32 8, %s361
        %s363 = smul.u32 %s362, 2
        %s364 = smul.u32 16, %s26
        %s365 = ssub.s32 17, %s364
        %p366 = scmp.lt.s32.totalorder %s365, 16
        %s367 = scalar_select %p366, %s365, 16
        %s368 = smul.u32 4, %s367
        %v369 = vld [vmem:[%s311] sm:$0xff]
        %v370 = vld [vmem:[%s311 + $0x8] sm:$0xff]
        %v371 = vld [vmem:[%s311 + $0x10] sm:$0xff]
        %v372 = vld [vmem:[%s311 + $0x18] sm:$0xff]
        %v373 = vld [vmem:[%s311 + $0x20] sm:$0xff]
        %v374 = vld [vmem:[%s311 + $0x28] sm:$0xff]
        %v375 = vld [vmem:[%s311 + $0x30] sm:$0xff]
        %v376 = vld [vmem:[%s311 + $0x38] sm:$0xff]
        %v377 = vld [vmem:[%s311 + $0x40] sm:$0xff]
        %v378 = vld [vmem:[%s311 + $0x48] sm:$0xff]
        %v379 = vld [vmem:[%s311 + $0x50] sm:$0xff]
        %v380 = vld [vmem:[%s311 + $0x58] sm:$0xff]
        %v381 = vld [vmem:[%s311 + $0x60] sm:$0xff]
        %v382 = vld [vmem:[%s311 + $0x68] sm:$0xff]
        %v383 = vld [vmem:[%s311 + $0x70] sm:$0xff]
        %v384 = vld [vmem:[%s311 + $0x78] sm:$0xff]
        %v385 = vld [vmem:[%s311 + $0x80] sm:$0xff]
        %v386 = vld [vmem:[%s311 + $0x88] sm:$0xff]
        %v387 = vld [vmem:[%s311 + $0x90] sm:$0xff]
        %v388 = vld [vmem:[%s311 + $0x98] sm:$0xff]
        %v389 = vld [vmem:[%s311 + $0xa0] sm:$0xff]
        %v390 = vld [vmem:[%s311 + $0xa8] sm:$0xff]
        %v391 = vld [vmem:[%s311 + $0xb0] sm:$0xff]
        %v392 = vld [vmem:[%s311 + $0xb8] sm:$0xff]
        %v393 = vld [vmem:[%s311 + $0xc0] sm:$0xff]
        %v394 = vld [vmem:[%s311 + $0xc8] sm:$0xff]
        %v395 = vld [vmem:[%s311 + $0xd0] sm:$0xff]
        %v396 = vld [vmem:[%s311 + $0xd8] sm:$0xff]
        %v397 = vld [vmem:[%s311 + $0xe0] sm:$0xff]
        %v398 = vld [vmem:[%s311 + $0xe8] sm:$0xff]
        %v399 = vld [vmem:[%s311 + $0xf0] sm:$0xff]
        %v400 = vld [vmem:[%s311 + $0xf8] sm:$0xff]
        %v401 = vpack.c.bf16 %v371, %v369
        %v402 = vpack.c.bf16 %v372, %v370
        %v403 = vpack.c.bf16 %v375, %v373
        %v404 = vpack.c.bf16 %v376, %v374
        %v405 = vpack.c.bf16 %v379, %v377
        %v406 = vpack.c.bf16 %v380, %v378
        %v407 = vpack.c.bf16 %v383, %v381
        %v408 = vpack.c.bf16 %v384, %v382
        %v409 = vpack.c.bf16 %v387, %v385
        %v410 = vpack.c.bf16 %v388, %v386
        %v411 = vpack.c.bf16 %v391, %v389
        %v412 = vpack.c.bf16 %v392, %v390
        %v413 = vpack.c.bf16 %v395, %v393
        %v414 = vpack.c.bf16 %v396, %v394
        %v415 = vpack.c.bf16 %v399, %v397
        %v416 = vpack.c.bf16 %v400, %v398
        %v417 = vld [vmem:[#allocation5] sm:$0xf]
        %v418 = vld [vmem:[#allocation5 + $0x4] sm:$0xf]
        %v419 = vld [vmem:[#allocation5 + $0x8] sm:$0xf]
        %v420 = vld [vmem:[#allocation5 + $0xc] sm:$0xf]
        %v421 = vld [vmem:[#allocation5 + $0x10] sm:$0xf]
        %v422 = vld [vmem:[#allocation5 + $0x14] sm:$0xf]
        %v423 = vld [vmem:[#allocation5 + $0x18] sm:$0xf]
        %v424 = vld [vmem:[#allocation5 + $0x1c] sm:$0xf]
        %v425 = vld [vmem:[#allocation5 + $0x20] sm:$0xf]
        %v426 = vld [vmem:[#allocation5 + $0x24] sm:$0xf]
        %v427 = vld [vmem:[#allocation5 + $0x28] sm:$0xf]
        %v428 = vld [vmem:[#allocation5 + $0x2c] sm:$0xf]
        %v429 = vld [vmem:[#allocation5 + $0x30] sm:$0xf]
        %v430 = vld [vmem:[#allocation5 + $0x34] sm:$0xf]
        %v431 = vld [vmem:[#allocation5 + $0x38] sm:$0xf]
        %v432 = vld [vmem:[#allocation5 + $0x3c] sm:$0xf]
        %v433 = vld [vmem:[#allocation5 + $0x40] sm:$0xf]
        %v434 = vld [vmem:[#allocation5 + $0x44] sm:$0xf]
        %v435 = vld [vmem:[#allocation5 + $0x48] sm:$0xf]
        %v436 = vld [vmem:[#allocation5 + $0x4c] sm:$0xf]
        %v437 = vld [vmem:[#allocation5 + $0x50] sm:$0xf]
        %v438 = vld [vmem:[#allocation5 + $0x54] sm:$0xf]
        %v439 = vld [vmem:[#allocation5 + $0x58] sm:$0xf]
        %v440 = vld [vmem:[#allocation5 + $0x5c] sm:$0xf]
        %v441 = vld [vmem:[#allocation5 + $0x60] sm:$0xf]
        %v442 = vld [vmem:[#allocation5 + $0x64] sm:$0xf]
        %v443 = vld [vmem:[#allocation5 + $0x68] sm:$0xf]
        %v444 = vld [vmem:[#allocation5 + $0x6c] sm:$0xf]
        %v445 = vld [vmem:[#allocation5 + $0x70] sm:$0xf]
        %v446 = vld [vmem:[#allocation5 + $0x74] sm:$0xf]
        %v447 = vld [vmem:[#allocation5 + $0x78] sm:$0xf]
        %v448 = vld [vmem:[#allocation5 + $0x7c] sm:$0xf]
        %v449 = vld [vmem:[%s2] sm:$0x1]
        %v451 = vperm.slane %v449, 0
        %v485 = vunpack.c.l.b16 %v417
        %v486 = vunpack.c.l.b16 %v418
        %v487 = vunpack.c.l.b16 %v419
        %v488 = vunpack.c.l.b16 %v420
        %v489 = vunpack.c.l.b16 %v421
        %v490 = vunpack.c.l.b16 %v422
        %v491 = vunpack.c.l.b16 %v423
        %v492 = vunpack.c.l.b16 %v424
        %v493 = vunpack.c.l.b16 %v425
        %v494 = vunpack.c.l.b16 %v426
        %v495 = vunpack.c.l.b16 %v427
        %v496 = vunpack.c.l.b16 %v428
        %v497 = vunpack.c.l.b16 %v429
        %v498 = vunpack.c.l.b16 %v430
        %v499 = vunpack.c.l.b16 %v431
        %v500 = vunpack.c.l.b16 %v432
        %v501 = vunpack.c.l.b16 %v433
        %v502 = vunpack.c.l.b16 %v434
        %v503 = vunpack.c.l.b16 %v435
        %v504 = vunpack.c.l.b16 %v436
        %v505 = vunpack.c.l.b16 %v437
        %v506 = vunpack.c.l.b16 %v438
        %v507 = vunpack.c.l.b16 %v439
        %v508 = vunpack.c.l.b16 %v440
        %v509 = vunpack.c.l.b16 %v441
        %v510 = vunpack.c.l.b16 %v442
        %v511 = vunpack.c.l.b16 %v443
        %v512 = vunpack.c.l.b16 %v444
        %v513 = vunpack.c.l.b16 %v445
        %v514 = vunpack.c.l.b16 %v446
        %v515 = vunpack.c.l.b16 %v447
        %v516 = vunpack.c.l.b16 %v448
        %v517 = vpack.c.b16 %v486, %v485
        %v518 = vpack.c.b16 %v488, %v487
        %v519 = vpack.c.b16 %v490, %v489
        %v520 = vpack.c.b16 %v492, %v491
        %v521 = vpack.c.b16 %v494, %v493
        %v522 = vpack.c.b16 %v496, %v495
        %v523 = vpack.c.b16 %v498, %v497
        %v524 = vpack.c.b16 %v500, %v499
        %v525 = vpack.c.b16 %v502, %v501
        %v526 = vpack.c.b16 %v504, %v503
        %v527 = vpack.c.b16 %v506, %v505
        %v528 = vpack.c.b16 %v508, %v507
        %v529 = vpack.c.b16 %v510, %v509
        %v530 = vpack.c.b16 %v512, %v511
        %v531 = vpack.c.b16 %v514, %v513
        %v532 = vpack.c.b16 %v516, %v515
        %549 = vmatpush.bf16.msra.mxu0 %v524
        %550 = vmatpush.bf16.msra.mxu0 %v523
        %551 = vmatpush.bf16.msra.mxu0 %v522
        %552 = vmatpush.bf16.msra.mxu0 %v521
        %553 = vmatpush.bf16.msra.mxu0 %v520
        %554 = vmatpush.bf16.msra.mxu0 %v519
        %555 = vmatpush.bf16.msra.mxu0 %v518
        %556 = vmatpush.bf16.msra.mxu0 %v517
        %557 = vmatmul.bf16.gmra.mxu0 %v401
        %v558 = vpop.f32.mrf.mxu0
        %v559 = vadd.f32 %v451, %v558
        %v560 = vpop.f32.mrf.mxu0
        %v561 = vadd.f32 %v451, %v560
        %562 = vmatmul.bf16.gmra.mxu0 %v403
        %v563 = vpop.f32.mrf.mxu0
        %v564 = vadd.f32 %v451, %v563
        %v565 = vpop.f32.mrf.mxu0
        %v566 = vadd.f32 %v451, %v565
        %567 = vmatmul.bf16.gmra.mxu0 %v405
        %v568 = vpop.f32.mrf.mxu0
        %v569 = vadd.f32 %v451, %v568
        %v570 = vpop.f32.mrf.mxu0
        %v571 = vadd.f32 %v451, %v570
        %572 = vmatmul.bf16.gmra.mxu0 %v407
        %v573 = vpop.f32.mrf.mxu0
        %v574 = vadd.f32 %v451, %v573
        %v575 = vpop.f32.mrf.mxu0
        %v576 = vadd.f32 %v451, %v575
        %577 = vmatmul.bf16.gmra.mxu0 %v409
        %v578 = vpop.f32.mrf.mxu0
        %v579 = vadd.f32 %v451, %v578
        %v580 = vpop.f32.mrf.mxu0
        %v581 = vadd.f32 %v451, %v580
        %582 = vmatmul.bf16.gmra.mxu0 %v411
        %v583 = vpop.f32.mrf.mxu0
        %v584 = vadd.f32 %v451, %v583
        %v585 = vpop.f32.mrf.mxu0
        %v586 = vadd.f32 %v451, %v585
        %587 = vmatmul.bf16.gmra.mxu0 %v413
        %v588 = vpop.f32.mrf.mxu0
        %v589 = vadd.f32 %v451, %v588
        %v590 = vpop.f32.mrf.mxu0
        %v591 = vadd.f32 %v451, %v590
        %592 = vmatmul.bf16.gmra.mxu0 %v415
        %v593 = vpop.f32.mrf.mxu0
        %v594 = vadd.f32 %v451, %v593
        %v595 = vpop.f32.mrf.mxu0
        %v596 = vadd.f32 %v451, %v595
        %597 = vdwg.mxu0
        %598 = vmatpush.bf16.msra.mxu0 %v532
        %599 = vmatpush.bf16.msra.mxu0 %v531
        %600 = vmatpush.bf16.msra.mxu0 %v530
        %601 = vmatpush.bf16.msra.mxu0 %v529
        %602 = vmatpush.bf16.msra.mxu0 %v528
        %603 = vmatpush.bf16.msra.mxu0 %v527
        %604 = vmatpush.bf16.msra.mxu0 %v526
        %605 = vmatpush.bf16.msra.mxu0 %v525
        %606 = vmatmul.bf16.gmra.mxu0 %v402
        %v607 = vpop.f32.mrf.mxu0
        %v608 = vadd.f32 %v559, %v607
        %v609 = vpop.f32.mrf.mxu0
        %v610 = vadd.f32 %v561, %v609
        %611 = vmatmul.bf16.gmra.mxu0 %v404
        %v612 = vpop.f32.mrf.mxu0
        %v613 = vadd.f32 %v564, %v612
        %v614 = vpop.f32.mrf.mxu0
        %v615 = vadd.f32 %v566, %v614
        %616 = vmatmul.bf16.gmra.mxu0 %v406
        %v617 = vpop.f32.mrf.mxu0
        %v618 = vadd.f32 %v569, %v617
        %v619 = vpop.f32.mrf.mxu0
        %v620 = vadd.f32 %v571, %v619
        %621 = vmatmul.bf16.gmra.mxu0 %v408
        %v622 = vpop.f32.mrf.mxu0
        %v623 = vadd.f32 %v574, %v622
        %v624 = vpop.f32.mrf.mxu0
        %v625 = vadd.f32 %v576, %v624
        %626 = vmatmul.bf16.gmra.mxu0 %v410
        %v627 = vpop.f32.mrf.mxu0
        %v628 = vadd.f32 %v579, %v627
        %v629 = vpop.f32.mrf.mxu0
        %v630 = vadd.f32 %v581, %v629
        %631 = vmatmul.bf16.gmra.mxu0 %v412
        %v632 = vpop.f32.mrf.mxu0
        %v633 = vadd.f32 %v584, %v632
        %v634 = vpop.f32.mrf.mxu0
        %v635 = vadd.f32 %v586, %v634
        %636 = vmatmul.bf16.gmra.mxu0 %v414
        %v637 = vpop.f32.mrf.mxu0
        %v638 = vadd.f32 %v589, %v637
        %v639 = vpop.f32.mrf.mxu0
        %v640 = vadd.f32 %v591, %v639
        %641 = vmatmul.bf16.gmra.mxu0 %v416
        %v642 = vpop.f32.mrf.mxu0
        %v643 = vadd.f32 %v594, %v642
        %v644 = vpop.f32.mrf.mxu0
        %v645 = vadd.f32 %v596, %v644
        %646 = vdwg.mxu0
        %v647 = vmax.f32 %v608, 0.0
        %v648 = vmax.f32 %v610, 0.0
        %v649 = vmax.f32 %v613, 0.0
        %v650 = vmax.f32 %v615, 0.0
        %v651 = vmax.f32 %v618, 0.0
        %v652 = vmax.f32 %v620, 0.0
        %v653 = vmax.f32 %v623, 0.0
        %v654 = vmax.f32 %v625, 0.0
        %v655 = vmax.f32 %v628, 0.0
        %v656 = vmax.f32 %v630, 0.0
        %v657 = vmax.f32 %v633, 0.0
        %v658 = vmax.f32 %v635, 0.0
        %v659 = vmax.f32 %v638, 0.0
        %v660 = vmax.f32 %v640, 0.0
        %v661 = vmax.f32 %v643, 0.0
        %v662 = vmax.f32 %v645, 0.0
        %v663 = vpack.c.bf16 %v648, %v647
        %v664 = vpack.c.bf16 %v650, %v649
        %v665 = vpack.c.bf16 %v652, %v651
        %v666 = vpack.c.bf16 %v654, %v653
        %v667 = vpack.c.bf16 %v656, %v655
        %v668 = vpack.c.bf16 %v658, %v657
        %v669 = vpack.c.bf16 %v660, %v659
        %v670 = vpack.c.bf16 %v662, %v661
        %v671 = vld [vmem:[#allocation7] sm:$0xf]
        %v672 = vld [vmem:[#allocation7 + $0x4] sm:$0xf]
        %v673 = vld [vmem:[#allocation7 + $0x8] sm:$0xf]
        %v674 = vld [vmem:[#allocation7 + $0xc] sm:$0xf]
        %v675 = vld [vmem:[#allocation7 + $0x10] sm:$0xf]
        %v676 = vld [vmem:[#allocation7 + $0x14] sm:$0xf]
        %v677 = vld [vmem:[#allocation7 + $0x18] sm:$0xf]
        %v678 = vld [vmem:[#allocation7 + $0x1c] sm:$0xf]
        %v679 = vld [vmem:[#allocation7 + $0x20] sm:$0xf]
        %v680 = vld [vmem:[#allocation7 + $0x24] sm:$0xf]
        %v681 = vld [vmem:[#allocation7 + $0x28] sm:$0xf]
        %v682 = vld [vmem:[#allocation7 + $0x2c] sm:$0xf]
        %v683 = vld [vmem:[#allocation7 + $0x30] sm:$0xf]
        %v684 = vld [vmem:[#allocation7 + $0x34] sm:$0xf]
        %v685 = vld [vmem:[#allocation7 + $0x38] sm:$0xf]
        %v686 = vld [vmem:[#allocation7 + $0x3c] sm:$0xf]
        %v687 = vld [vmem:[%s4] sm:$0x1]
        %v689 = vperm.slane %v687, 0
        %v707 = vunpack.c.l.b16 %v671
        %v708 = vunpack.c.l.b16 %v672
        %v709 = vunpack.c.l.b16 %v673
        %v710 = vunpack.c.l.b16 %v674
        %v711 = vunpack.c.l.b16 %v675
        %v712 = vunpack.c.l.b16 %v676
        %v713 = vunpack.c.l.b16 %v677
        %v714 = vunpack.c.l.b16 %v678
        %v715 = vunpack.c.l.b16 %v679
        %v716 = vunpack.c.l.b16 %v680
        %v717 = vunpack.c.l.b16 %v681
        %v718 = vunpack.c.l.b16 %v682
        %v719 = vunpack.c.l.b16 %v683
        %v720 = vunpack.c.l.b16 %v684
        %v721 = vunpack.c.l.b16 %v685
        %v722 = vunpack.c.l.b16 %v686
        %v723 = vpack.c.b16 %v708, %v707
        %v724 = vpack.c.b16 %v710, %v709
        %v725 = vpack.c.b16 %v712, %v711
        %v726 = vpack.c.b16 %v714, %v713
        %v727 = vpack.c.b16 %v716, %v715
        %v728 = vpack.c.b16 %v718, %v717
        %v729 = vpack.c.b16 %v720, %v719
        %v730 = vpack.c.b16 %v722, %v721
        %739 = vmatpush.bf16.msra.mxu0 %v730
        %740 = vmatpush.bf16.msra.mxu0 %v729
        %741 = vmatpush.bf16.msra.mxu0 %v728
        %742 = vmatpush.bf16.msra.mxu0 %v727
        %743 = vmatpush.bf16.msra.mxu0 %v726
        %744 = vmatpush.bf16.msra.mxu0 %v725
        %745 = vmatpush.bf16.msra.mxu0 %v724
        %746 = vmatpush.bf16.msra.mxu0 %v723
        %747 = vmatmul.bf16.gmra.mxu0 %v663
        %v748 = vpop.f32.mrf.mxu0
        %v749 = vadd.f32 %v689, %v748
        %v750 = vpop.f32.mrf.mxu0
        %v751 = vadd.f32 %v689, %v750
        %752 = vmatmul.bf16.gmra.mxu0 %v664
        %v753 = vpop.f32.mrf.mxu0
        %v754 = vadd.f32 %v689, %v753
        %v755 = vpop.f32.mrf.mxu0
        %v756 = vadd.f32 %v689, %v755
        %757 = vmatmul.bf16.gmra.mxu0 %v665
        %v758 = vpop.f32.mrf.mxu0
        %v759 = vadd.f32 %v689, %v758
        %v760 = vpop.f32.mrf.mxu0
        %v761 = vadd.f32 %v689, %v760
        %762 = vmatmul.bf16.gmra.mxu0 %v666
        %v763 = vpop.f32.mrf.mxu0
        %v764 = vadd.f32 %v689, %v763
        %v765 = vpop.f32.mrf.mxu0
        %v766 = vadd.f32 %v689, %v765
        %767 = vmatmul.bf16.gmra.mxu0 %v667
        %v768 = vpop.f32.mrf.mxu0
        %v769 = vadd.f32 %v689, %v768
        %v770 = vpop.f32.mrf.mxu0
        %v771 = vadd.f32 %v689, %v770
        %772 = vmatmul.bf16.gmra.mxu0 %v668
        %v773 = vpop.f32.mrf.mxu0
        %v774 = vadd.f32 %v689, %v773
        %v775 = vpop.f32.mrf.mxu0
        %v776 = vadd.f32 %v689, %v775
        %777 = vmatmul.bf16.gmra.mxu0 %v669
        %v778 = vpop.f32.mrf.mxu0
        %v779 = vadd.f32 %v689, %v778
        %v780 = vpop.f32.mrf.mxu0
        %v781 = vadd.f32 %v689, %v780
        %782 = vmatmul.bf16.gmra.mxu0 %v670
        %v783 = vpop.f32.mrf.mxu0
        %v784 = vadd.f32 %v689, %v783
        %v785 = vpop.f32.mrf.mxu0
        %v786 = vadd.f32 %v689, %v785
        %787 = vdwg.mxu0
        %v788 = vmax.f32 %v749, 0.0
        %v789 = vmax.f32 %v751, 0.0
        %v790 = vmax.f32 %v754, 0.0
        %v791 = vmax.f32 %v756, 0.0
        %v792 = vmax.f32 %v759, 0.0
        %v793 = vmax.f32 %v761, 0.0
        %v794 = vmax.f32 %v764, 0.0
        %v795 = vmax.f32 %v766, 0.0
        %v796 = vmax.f32 %v769, 0.0
        %v797 = vmax.f32 %v771, 0.0
        %v798 = vmax.f32 %v774, 0.0
        %v799 = vmax.f32 %v776, 0.0
        %v800 = vmax.f32 %v779, 0.0
        %v801 = vmax.f32 %v781, 0.0
        %v802 = vmax.f32 %v784, 0.0
        %v803 = vmax.f32 %v786, 0.0
        %v804 = vpack.c.bf16 %v789, %v788
        %v805 = vpack.c.bf16 %v791, %v790
        %v806 = vpack.c.bf16 %v793, %v792
        %v807 = vpack.c.bf16 %v795, %v794
        %v808 = vpack.c.bf16 %v797, %v796
        %v809 = vpack.c.bf16 %v799, %v798
        %v810 = vpack.c.bf16 %v801, %v800
        %v811 = vpack.c.bf16 %v803, %v802
        %v812 = vld [vmem:[#allocation8] sm:$0xf]
        %v813 = vld [vmem:[#allocation8 + $0x4] sm:$0xf]
        %v814 = vld [vmem:[#allocation8 + $0x8] sm:$0xf]
        %v815 = vld [vmem:[#allocation8 + $0xc] sm:$0xf]
        %v816 = vld [vmem:[#allocation8 + $0x10] sm:$0xf]
        %v817 = vld [vmem:[#allocation8 + $0x14] sm:$0xf]
        %v818 = vld [vmem:[#allocation8 + $0x18] sm:$0xf]
        %v819 = vld [vmem:[#allocation8 + $0x1c] sm:$0xf]
        %v820 = vld [vmem:[#allocation8 + $0x20] sm:$0xf]
        %v821 = vld [vmem:[#allocation8 + $0x24] sm:$0xf]
        %v822 = vld [vmem:[#allocation8 + $0x28] sm:$0xf]
        %v823 = vld [vmem:[#allocation8 + $0x2c] sm:$0xf]
        %v824 = vld [vmem:[#allocation8 + $0x30] sm:$0xf]
        %v825 = vld [vmem:[#allocation8 + $0x34] sm:$0xf]
        %v826 = vld [vmem:[#allocation8 + $0x38] sm:$0xf]
        %v827 = vld [vmem:[#allocation8 + $0x3c] sm:$0xf]
        %v828 = vld [vmem:[%s6] sm:$0x1]
        %v830 = vperm.slane %v828, 0
        %v848 = vunpack.c.l.b16 %v812
        %v849 = vunpack.c.l.b16 %v813
        %v850 = vunpack.c.l.b16 %v814
        %v851 = vunpack.c.l.b16 %v815
        %v852 = vunpack.c.l.b16 %v816
        %v853 = vunpack.c.l.b16 %v817
        %v854 = vunpack.c.l.b16 %v818
        %v855 = vunpack.c.l.b16 %v819
        %v856 = vunpack.c.l.b16 %v820
        %v857 = vunpack.c.l.b16 %v821
        %v858 = vunpack.c.l.b16 %v822
        %v859 = vunpack.c.l.b16 %v823
        %v860 = vunpack.c.l.b16 %v824
        %v861 = vunpack.c.l.b16 %v825
        %v862 = vunpack.c.l.b16 %v826
        %v863 = vunpack.c.l.b16 %v827
        %v864 = vpack.c.b16 %v849, %v848
        %v865 = vpack.c.b16 %v851, %v850
        %v866 = vpack.c.b16 %v853, %v852
        %v867 = vpack.c.b16 %v855, %v854
        %v868 = vpack.c.b16 %v857, %v856
        %v869 = vpack.c.b16 %v859, %v858
        %v870 = vpack.c.b16 %v861, %v860
        %v871 = vpack.c.b16 %v863, %v862
        %880 = vmatpush.bf16.msra.mxu0 %v871
        %881 = vmatpush.bf16.msra.mxu0 %v870
        %882 = vmatpush.bf16.msra.mxu0 %v869
        %883 = vmatpush.bf16.msra.mxu0 %v868
        %884 = vmatpush.bf16.msra.mxu0 %v867
        %885 = vmatpush.bf16.msra.mxu0 %v866
        %886 = vmatpush.bf16.msra.mxu0 %v865
        %887 = vmatpush.bf16.msra.mxu0 %v864
        %888 = vmatmul.bf16.gmra.mxu0 %v804
        %v889 = vpop.f32.mrf.mxu0
        %v890 = vadd.f32 %v830, %v889
        %v891 = vpop.f32.mrf.mxu0
        %v892 = vadd.f32 %v830, %v891
        %893 = vmatmul.bf16.gmra.mxu0 %v805
        %v894 = vpop.f32.mrf.mxu0
        %v895 = vadd.f32 %v830, %v894
        %v896 = vpop.f32.mrf.mxu0
        %v897 = vadd.f32 %v830, %v896
        %898 = vmatmul.bf16.gmra.mxu0 %v806
        %v899 = vpop.f32.mrf.mxu0
        %v900 = vadd.f32 %v830, %v899
        %v901 = vpop.f32.mrf.mxu0
        %v902 = vadd.f32 %v830, %v901
        %903 = vmatmul.bf16.gmra.mxu0 %v807
        %v904 = vpop.f32.mrf.mxu0
        %v905 = vadd.f32 %v830, %v904
        %v906 = vpop.f32.mrf.mxu0
        %v907 = vadd.f32 %v830, %v906
        %908 = vmatmul.bf16.gmra.mxu0 %v808
        %v909 = vpop.f32.mrf.mxu0
        %v910 = vadd.f32 %v830, %v909
        %v911 = vpop.f32.mrf.mxu0
        %v912 = vadd.f32 %v830, %v911
        %913 = vmatmul.bf16.gmra.mxu0 %v809
        %v914 = vpop.f32.mrf.mxu0
        %v915 = vadd.f32 %v830, %v914
        %v916 = vpop.f32.mrf.mxu0
        %v917 = vadd.f32 %v830, %v916
        %918 = vmatmul.bf16.gmra.mxu0 %v810
        %v919 = vpop.f32.mrf.mxu0
        %v920 = vadd.f32 %v830, %v919
        %v921 = vpop.f32.mrf.mxu0
        %v922 = vadd.f32 %v830, %v921
        %923 = vmatmul.bf16.gmra.mxu0 %v811
        %v924 = vpop.f32.mrf.mxu0
        %v925 = vadd.f32 %v830, %v924
        %v926 = vpop.f32.mrf.mxu0
        %v927 = vadd.f32 %v830, %v926
        %928 = vdwg.mxu0
        %v929 = vpack.c.bf16 %v890, %v890
        %v930 = vpack.c.bf16 %v892, %v892
        %v931 = vpack.c.bf16 %v895, %v895
        %v932 = vpack.c.bf16 %v897, %v897
        %v933 = vpack.c.bf16 %v900, %v900
        %v934 = vpack.c.bf16 %v902, %v902
        %v935 = vpack.c.bf16 %v905, %v905
        %v936 = vpack.c.bf16 %v907, %v907
        %v937 = vpack.c.bf16 %v910, %v910
        %v938 = vpack.c.bf16 %v912, %v912
        %v939 = vpack.c.bf16 %v915, %v915
        %v940 = vpack.c.bf16 %v917, %v917
        %v941 = vpack.c.bf16 %v920, %v920
        %v942 = vpack.c.bf16 %v922, %v922
        %v943 = vpack.c.bf16 %v925, %v925
        %v944 = vpack.c.bf16 %v927, %v927
        %945 = vst [vmem:[%s357] sm:$0xf] %v929
        %946 = vst [vmem:[%s357 + $0x4] sm:$0xf] %v930
        %947 = vst [vmem:[%s357 + $0x8] sm:$0xf] %v931
        %948 = vst [vmem:[%s357 + $0xc] sm:$0xf] %v932
        %949 = vst [vmem:[%s357 + $0x10] sm:$0xf] %v933
        %950 = vst [vmem:[%s357 + $0x14] sm:$0xf] %v934
        %951 = vst [vmem:[%s357 + $0x18] sm:$0xf] %v935
        %952 = vst [vmem:[%s357 + $0x1c] sm:$0xf] %v936
        %953 = vst [vmem:[%s357 + $0x20] sm:$0xf] %v937
        %954 = vst [vmem:[%s357 + $0x24] sm:$0xf] %v938
        %955 = vst [vmem:[%s357 + $0x28] sm:$0xf] %v939
        %956 = vst [vmem:[%s357 + $0x2c] sm:$0xf] %v940
        %957 = vst [vmem:[%s357 + $0x30] sm:$0xf] %v941
        %958 = vst [vmem:[%s357 + $0x34] sm:$0xf] %v942
        %959 = vst [vmem:[%s357 + $0x38] sm:$0xf] %v943
        %960 = vst [vmem:[%s357 + $0x3c] sm:$0xf] %v944
        %s961 = sand.u32 %s186, 1
        %s962 = scalar_lea.sflag [#allocation4], %s961
        %s963 = sand.u32 %s186, 1
        %s964 = smul.addr %s963, 64
        %s965 = scalar_lea.vmem [#allocation10], %s964
        // Predicated region
        $region65: #{tpu_custom_call.1} parent=47 // pred_check
          %p966 = pneg %p196
        $region66: #{tpu_custom_call.1} parent=47 // pred_check_branch
          %968 = sbr.rel (%p966) target = $region68
        $region67: #{tpu_custom_call.1} parent=47 // pred_region
          %s969 = smul.u32 16, %s26
          %s970 = ssub.s32 17, %s969
          %p971 = scmp.lt.s32.totalorder %s970, 16
          %s972 = scalar_select %p971, %s970, 16
          %s973 = smul.u32 4, %s972
          %s974 = ssub.s32 64, %s973
          %s975 = sshll.u32 %s974, 4
          %976 = vsyncadd %s962, %s975
          %p977 = scmp.ne.s32.totalorder 0, %s973
          %s978 = smul.addr %s969, 4
          %s979 = scalar_lea.hbm %s7, %s978
          %s980 = smul.u32 4, %s972
          %s981 = sshll.u32 %s965, 4
          %s982 = int_to_ptr.vmem [resolvable:$true] %s981
          %s983 = sshll.u32 %s979, 4
          %s984 = int_to_ptr.hbm [resolvable:$true] %s983
          %s985 = sshll.u32 %s980, 4
          %989 = dma.vmem_to_hbm [thread:$0]  (%p977), %s982, %s985, %s984, %s962, 64, 64, 4
        $region68: #{tpu_custom_call.1} parent=47 // pred_fallthru
          _
      $region48: #{tpu_custom_call.1} parent=5 // pred_fallthru
        _
      %p990 = scmp.le.s32.totalorder 2, %s21
      // Predicated region
      $region69: #{tpu_custom_call.1} parent=5 // pred_check
        %p991 = pneg %p990
      $region70: #{tpu_custom_call.1} parent=5 // pred_check_branch
        %993 = sbr.rel (%p991) target = $region72
      $region71: #{tpu_custom_call.1} parent=5 // pred_region
        %s994 = ssub.s32 %s21, 2
        // Predicated region
        $region73: #{tpu_custom_call.1} parent=71 // pred_check
          %p995 = pneg %p202
        $region74: #{tpu_custom_call.1} parent=71 // pred_check_branch
          %997 = sbr.rel (%p995) target = $region76
        $region75: #{tpu_custom_call.1} parent=71 // pred_region
          %s998 = sand.u32 %s187, 1
          %s999 = scalar_lea.sflag [#allocation4], %s998
          %s1000 = sand.u32 %s187, 1
          %s1001 = smul.addr %s1000, 64
          %s1002 = scalar_lea.vmem [#allocation10], %s1001
          %1004 = dma.done %s999, 1024
        $region76: #{tpu_custom_call.1} parent=71 // pred_fallthru
          _
      $region72: #{tpu_custom_call.1} parent=5 // pred_fallthru
        _
    $region6: #{tpu_custom_call.1} parent=1 // loop_footer
      %s25 = sadd.s32 1, %s21
    $region7: #{tpu_custom_call.1} parent=1 // loop_footer_branch
      %20 = sbr.rel target = $region3
    $region8: #{tpu_custom_call.1} parent=1 // loop_exit
      _
    %1005 = vsyncpa [#allocation3], 1
    %s1006 = scalar_lea.sflag [#allocation3], 1
    %1007 = vsyncpa %s1006, 1
    %1008 = vsyncpa [#allocation6], 1
    %1009 = vsyncpa [#allocation9], 1
    %1010 = vsyncpa [#allocation4], 1
    %s1011 = scalar_lea.sflag [#allocation4], 1
    %1012 = vsyncpa %s1011, 1

</llo_original>
